<compile_context>
chip_gen: v7x
topology: tpu7x:2x2x1
jax: 0.10.0
libtpu: 0.0.40
codegen_flags: <defaults>
</compile_context>

<pallas_src>
import functools

import jax
import jax.numpy as jnp
from jax import lax
from jax.experimental import pallas as pl
from jax.experimental.pallas import tpu as pltpu


# ---------------------------------------------------------------------------
# Fused kernel: 1x1 conv(+BN+ReLU) -> vregs -> 3x3 conv(+BN+ReLU)
# ---------------------------------------------------------------------------
def denselayer_bc_kernel(x_ref, w1_ref, b1_ref, mask_ref, w2_ref, b2_ref,
                         o_ref, *, wp):
    # x_ref   : (1, Cin, S)     bf16  zero-padded image, spatial flattened
    #                                  S = (H+2)*(W+2) + 2 guard lanes
    # w1_ref  : (C1, Cin)       bf16  BN1-folded 1x1 weights
    # b1_ref  : (C1, 1)         f32   BN1-folded bias
    # mask_ref: (1, S)          f32   1.0 on real pixels, 0.0 on pad ring
    # w2_ref  : (9, Cg, C1)     bf16  BN2-folded 3x3 weights, tap-major
    # b2_ref  : (Cg, 1)         f32   BN2-folded bias
    # o_ref   : (1, Cg, S_out)  f32   S_out = H*(W+2) (junk cols sliced later)
    # wp      : W + 2 (padded row stride), static
    s_out = o_ref.shape[2]

    # ---- stage 1: 1x1 conv + BN + ReLU, channels-major, all in vregs ------
    x = x_ref[0]                                            # (Cin, S) bf16
    h = jnp.dot(w1_ref[...], x, preferred_element_type=jnp.float32)
    h = jnp.maximum(h + b1_ref[...], 0.0) * mask_ref[...]   # f32 epilogue
    h = h.astype(jnp.bfloat16)                              # (C1, S)

    # ---- stage 2: 3x3 conv as 9 tap matmuls; each RHS is a contiguous -----
    # lane slice of the flattened padded h; accumulate in vregs (not VMEM).
    acc = None
    for ky in range(3):
        for kx in range(3):
            off = ky * wp + kx
            rhs = h[:, off:off + s_out]                     # (C1, S_out) bf16
            part = jnp.dot(w2_ref[ky * 3 + kx], rhs,
                           preferred_element_type=jnp.float32)
            acc = part if acc is None else acc + part       # (Cg, S_out) f32

    o_ref[0] = jnp.maximum(acc + b2_ref[...], 0.0).astype(o_ref.dtype)


# ---------------------------------------------------------------------------
# Wrapper: padding, BN folding, layout prep, pallas_call, concat with input.
# ---------------------------------------------------------------------------
def _fold_bn_into_conv(w, b, gamma, beta, mean, var, eps=1e-5):
    scale = gamma / jnp.sqrt(var + eps)              # per output channel
    shift = beta - mean * scale
    return w * scale, b * scale + shift


@jax.jit
def denselayer_bc_forward(x_nchw, params):
    N, Cin, H, W = x_nchw.shape
    C1 = params["w1"].shape[1]
    Cg = params["w2"].shape[-1]
    Wp = W + 2
    S = (H + 2) * Wp + 2           # +2 guard lanes so every tap slice fits
    S_out = H * Wp

    # Zero-pad the input spatially (the SAME padding of both convs comes from
    # this ring; the bottleneck activation's ring is forced to zero in-kernel
    # with `mask`), then flatten the spatial axes onto the lane dimension.
    xp = jnp.pad(x_nchw, ((0, 0), (0, 0), (1, 1), (1, 1)))
    xp = xp.reshape(N, Cin, (H + 2) * Wp)
    xp = jnp.pad(xp, ((0, 0), (0, 0), (0, 2)))              # guard lanes
    xp = xp.astype(jnp.bfloat16)

    mask = jnp.pad(jnp.ones((H, W), jnp.float32), ((1, 1), (1, 1)))
    mask = jnp.pad(mask.reshape(1, (H + 2) * Wp), ((0, 0), (0, 2)))

    # Fold eval-mode BatchNorm (+ conv bias) into the conv weights.
    w1f, b1f = _fold_bn_into_conv(params["w1"], params["b1"],
                                  params["bn1_g"], params["bn1_b"],
                                  params["bn1_m"], params["bn1_v"])
    w2f, b2f = _fold_bn_into_conv(params["w2"], params["b2"],
                                  params["bn2_g"], params["bn2_b"],
                                  params["bn2_m"], params["bn2_v"])
    w1_cm = w1f.T.astype(jnp.bfloat16)                               # (C1, Cin)
    w2_taps = jnp.transpose(w2f, (0, 1, 3, 2)).reshape(9, Cg, C1)    # tap-major
    w2_taps = w2_taps.astype(jnp.bfloat16)                           # (9, Cg, C1)

    out_flat = pl.pallas_call(
        functools.partial(denselayer_bc_kernel, wp=Wp),
        out_shape=jax.ShapeDtypeStruct((N, Cg, S_out), jnp.float32),
        grid_spec=pltpu.PrefetchScalarGridSpec(
            num_scalar_prefetch=0,
            grid=(N,),
            in_specs=[
                pl.BlockSpec((1, Cin, S), lambda n: (n, 0, 0)),
                pl.BlockSpec((C1, Cin), lambda n: (0, 0)),
                pl.BlockSpec((C1, 1), lambda n: (0, 0)),
                pl.BlockSpec((1, S), lambda n: (0, 0)),
                pl.BlockSpec((9, Cg, C1), lambda n: (0, 0, 0)),
                pl.BlockSpec((Cg, 1), lambda n: (0, 0)),
            ],
            out_specs=pl.BlockSpec((1, Cg, S_out), lambda n: (n, 0, 0)),
        ),
        compiler_params=pltpu.CompilerParams(
            dimension_semantics=("parallel",)),
    )(xp, w1_cm, b1f.reshape(C1, 1), mask, w2_taps, b2f.reshape(Cg, 1))

    # Drop the 2 junk columns per row that the padded-width layout carries,
    # then concatenate with the (exact, f32) input along channels (NCHW).
    out_nchw = out_flat.reshape(N, Cg, H, Wp)[:, :, :, :W]
    return jnp.concatenate([x_nchw, out_nchw], axis=1)


# ---------------------------------------------------------------------------
# Pure-JAX f32 reference (for the correctness check)
# ---------------------------------------------------------------------------
def reference_forward(x_nchw, params):
    x = jnp.transpose(x_nchw, (0, 2, 3, 1))
    Cin = x.shape[-1]
    C1 = params["w1"].shape[1]

    def bn(y, g, b, m, v, eps=1e-5):
        return (y - m) / jnp.sqrt(v + eps) * g + b

    h = lax.conv_general_dilated(
        x, params["w1"].reshape(1, 1, Cin, C1), (1, 1), "VALID",
        dimension_numbers=("NHWC", "HWIO", "NHWC")) + params["b1"]
    h = jnp.maximum(bn(h, params["bn1_g"], params["bn1_b"],
                       params["bn1_m"], params["bn1_v"]), 0.0)
    o = lax.conv_general_dilated(
        h, params["w2"], (1, 1), "SAME",
        dimension_numbers=("NHWC", "HWIO", "NHWC")) + params["b2"]
    o = jnp.maximum(bn(o, params["bn2_g"], params["bn2_b"],
                       params["bn2_m"], params["bn2_v"]), 0.0)
    return jnp.concatenate([x_nchw, jnp.transpose(o, (0, 3, 1, 2))], axis=1)


# ---------------------------------------------------------------------------
if __name__ == "__main__":
    # TODO(synk): Dropout2d is implemented as identity (inference mode);
    # training-mode channel dropout has no deterministic equivalent here.
    key = jax.random.PRNGKey(0)
    k_x, k_w1, k_b1, k_w2, k_b2, k_g1, k_g2 = jax.random.split(key, 7)

    N, Cin, H, W = 2, 4, 16, 16
    growth = 8
    C1 = 4 * growth      # 32 bottleneck channels
    Cg = growth          # 8 new channels

    x = jax.random.normal(k_x, (N, Cin, H, W), jnp.float32)

    params = {
        # conv1: PyTorch weight (C1, Cin, 1, 1) stored here as (Cin, C1)
        "w1": 0.1 * jax.random.normal(k_w1, (Cin, C1), jnp.float32),
        "b1": 0.1 * jax.random.normal(k_b1, (C1,), jnp.float32),
        # BN1 (eval-mode stats)
        "bn1_g": 1.0 + 0.1 * jax.random.normal(k_g1, (C1,), jnp.float32),
        "bn1_b": jnp.linspace(-0.1, 0.1, C1, dtype=jnp.float32),
        "bn1_m": jnp.linspace(-0.05, 0.05, C1, dtype=jnp.float32),
        "bn1_v": jnp.full((C1,), 1.2, jnp.float32),
        # conv2: PyTorch weight (Cg, C1, 3, 3) stored here as HWIO (3,3,C1,Cg)
        "w2": 0.05 * jax.random.normal(k_w2, (3, 3, C1, Cg), jnp.float32),
        "b2": 0.1 * jax.random.normal(k_b2, (Cg,), jnp.float32),
        # BN2
        "bn2_g": 1.0 + 0.1 * jax.random.normal(k_g2, (Cg,), jnp.float32),
        "bn2_b": jnp.linspace(-0.2, 0.2, Cg, dtype=jnp.float32),
        "bn2_m": jnp.linspace(-0.02, 0.02, Cg, dtype=jnp.float32),
        "bn2_v": jnp.full((Cg,), 0.9, jnp.float32),
    }

    y = denselayer_bc_forward(x, params)
    y = jax.block_until_ready(y)
    assert y.shape == (N, Cin + Cg, H, W), y.shape

    y_ref = jax.block_until_ready(reference_forward(x, params))
    err = float(jnp.max(jnp.abs(y - y_ref)))
    # bf16 matmul operands (f32 accumulation / epilogue) vs an f32 reference.
    assert err < 2e-2, f"mismatch vs reference: {err}"

    print("KERNEL_OK")
</pallas_src>

<mosaic_0001>
module attributes {stable_mosaic.version = 11 : i64} {
  func.func @denselayer_bc_kernel(%arg0: i32, %arg1: memref<1x4x326xbf16, #tpu.memory_space<vmem>>, %arg2: memref<32x4xbf16, #tpu.memory_space<vmem>>, %arg3: memref<32x1xf32, #tpu.memory_space<vmem>>, %arg4: memref<1x326xf32, #tpu.memory_space<vmem>>, %arg5: memref<9x8x32xbf16, #tpu.memory_space<vmem>>, %arg6: memref<8x1xf32, #tpu.memory_space<vmem>>, %arg7: memref<1x8x288xf32, #tpu.memory_space<vmem>>) attributes {dimension_semantics = [#tpu.dimension_semantics<parallel>], iteration_bounds = array<i64: 2>, scalar_prefetch = 0 : i64, scratch_operands = 0 : i64, tpu.core_type = #tpu.core_type<tc>, window_params = [{transform_indices = @transform_0, window_bounds = array<i64: 1, 4, 326>}, {pipeline_mode = #tpu.pipeline_mode<synchronous>, transform_indices = @transform_1, window_bounds = array<i64: 32, 4>}, {pipeline_mode = #tpu.pipeline_mode<synchronous>, transform_indices = @transform_2, window_bounds = array<i64: 32, 1>}, {pipeline_mode = #tpu.pipeline_mode<synchronous>, transform_indices = @transform_3, window_bounds = array<i64: 1, 326>}, {pipeline_mode = #tpu.pipeline_mode<synchronous>, transform_indices = @transform_4, window_bounds = array<i64: 9, 8, 32>}, {pipeline_mode = #tpu.pipeline_mode<synchronous>, transform_indices = @transform_5, window_bounds = array<i64: 8, 1>}, {transform_indices = @transform_6, window_bounds = array<i64: 1, 8, 288>}]} {
    %c0 = arith.constant 0 : index
    %c0_0 = arith.constant 0 : index
    %c0_1 = arith.constant 0 : index
    %0 = vector.load %arg1[%c0, %c0_0, %c0_1] : memref<1x4x326xbf16, #tpu.memory_space<vmem>>, vector<1x4x326xbf16>
    %1 = vector.shape_cast %0 : vector<1x4x326xbf16> to vector<4x326xbf16>
    %c0_2 = arith.constant 0 : index
    %c0_3 = arith.constant 0 : index
    %2 = vector.load %arg2[%c0_2, %c0_3] : memref<32x4xbf16, #tpu.memory_space<vmem>>, vector<32x4xbf16>
    %cst = arith.constant dense<0.000000e+00> : vector<32x326xf32>
    %3 = tpu.matmul %2, %1, %cst {dimension_numbers = #tpu.dot_dimension_numbers<[1], [0], [0], [1], [0, 0, 1, 1], [], []>} : vector<32x4xbf16>, vector<4x326xbf16>, vector<32x326xf32> -> vector<32x326xf32>
    %c0_4 = arith.constant 0 : index
    %c0_5 = arith.constant 0 : index
    %4 = vector.load %arg3[%c0_4, %c0_5] : memref<32x1xf32, #tpu.memory_space<vmem>>, vector<32x1xf32>
    %5 = vector.broadcast %4 : vector<32x1xf32> to vector<32x326xf32>
    %6 = arith.addf %3, %5 : vector<32x326xf32>
    %cst_6 = arith.constant 0.000000e+00 : f32
    %7 = vector.broadcast %cst_6 : f32 to vector<32x326xf32>
    %8 = arith.maximumf %6, %7 : vector<32x326xf32>
    %c0_7 = arith.constant 0 : index
    %c0_8 = arith.constant 0 : index
    %9 = vector.load %arg4[%c0_7, %c0_8] : memref<1x326xf32, #tpu.memory_space<vmem>>, vector<1x326xf32>
    %10 = vector.broadcast %9 : vector<1x326xf32> to vector<32x326xf32>
    %11 = arith.mulf %8, %10 : vector<32x326xf32>
    %12 = arith.truncf %11 : vector<32x326xf32> to vector<32x326xbf16>
    %13 = vector.extract_strided_slice %12 {offsets = [0, 0], sizes = [32, 288], strides = [1, 1]} : vector<32x326xbf16> to vector<32x288xbf16>
    %c0_9 = arith.constant 0 : index
    %c0_10 = arith.constant 0 : index
    %c0_11 = arith.constant 0 : index
    %14 = vector.load %arg5[%c0_9, %c0_10, %c0_11] : memref<9x8x32xbf16, #tpu.memory_space<vmem>>, vector<1x8x32xbf16>
    %15 = vector.shape_cast %14 : vector<1x8x32xbf16> to vector<8x32xbf16>
    %cst_12 = arith.constant dense<0.000000e+00> : vector<8x288xf32>
    %16 = tpu.matmul %15, %13, %cst_12 {dimension_numbers = #tpu.dot_dimension_numbers<[1], [0], [0], [1], [0, 0, 1, 1], [], []>} : vector<8x32xbf16>, vector<32x288xbf16>, vector<8x288xf32> -> vector<8x288xf32>
    %17 = vector.extract_strided_slice %12 {offsets = [0, 1], sizes = [32, 288], strides = [1, 1]} : vector<32x326xbf16> to vector<32x288xbf16>
    %c1 = arith.constant 1 : index
    %c0_13 = arith.constant 0 : index
    %c0_14 = arith.constant 0 : index
    %18 = vector.load %arg5[%c1, %c0_13, %c0_14] : memref<9x8x32xbf16, #tpu.memory_space<vmem>>, vector<1x8x32xbf16>
    %19 = vector.shape_cast %18 : vector<1x8x32xbf16> to vector<8x32xbf16>
    %cst_15 = arith.constant dense<0.000000e+00> : vector<8x288xf32>
    %20 = tpu.matmul %19, %17, %cst_15 {dimension_numbers = #tpu.dot_dimension_numbers<[1], [0], [0], [1], [0, 0, 1, 1], [], []>} : vector<8x32xbf16>, vector<32x288xbf16>, vector<8x288xf32> -> vector<8x288xf32>
    %21 = arith.addf %16, %20 : vector<8x288xf32>
    %22 = vector.extract_strided_slice %12 {offsets = [0, 2], sizes = [32, 288], strides = [1, 1]} : vector<32x326xbf16> to vector<32x288xbf16>
    %c2 = arith.constant 2 : index
    %c0_16 = arith.constant 0 : index
    %c0_17 = arith.constant 0 : index
    %23 = vector.load %arg5[%c2, %c0_16, %c0_17] : memref<9x8x32xbf16, #tpu.memory_space<vmem>>, vector<1x8x32xbf16>
    %24 = vector.shape_cast %23 : vector<1x8x32xbf16> to vector<8x32xbf16>
    %cst_18 = arith.constant dense<0.000000e+00> : vector<8x288xf32>
    %25 = tpu.matmul %24, %22, %cst_18 {dimension_numbers = #tpu.dot_dimension_numbers<[1], [0], [0], [1], [0, 0, 1, 1], [], []>} : vector<8x32xbf16>, vector<32x288xbf16>, vector<8x288xf32> -> vector<8x288xf32>
    %26 = arith.addf %21, %25 : vector<8x288xf32>
    %27 = vector.extract_strided_slice %12 {offsets = [0, 18], sizes = [32, 288], strides = [1, 1]} : vector<32x326xbf16> to vector<32x288xbf16>
    %c3 = arith.constant 3 : index
    %c0_19 = arith.constant 0 : index
    %c0_20 = arith.constant 0 : index
    %28 = vector.load %arg5[%c3, %c0_19, %c0_20] : memref<9x8x32xbf16, #tpu.memory_space<vmem>>, vector<1x8x32xbf16>
    %29 = vector.shape_cast %28 : vector<1x8x32xbf16> to vector<8x32xbf16>
    %cst_21 = arith.constant dense<0.000000e+00> : vector<8x288xf32>
    %30 = tpu.matmul %29, %27, %cst_21 {dimension_numbers = #tpu.dot_dimension_numbers<[1], [0], [0], [1], [0, 0, 1, 1], [], []>} : vector<8x32xbf16>, vector<32x288xbf16>, vector<8x288xf32> -> vector<8x288xf32>
    %31 = arith.addf %26, %30 : vector<8x288xf32>
    %32 = vector.extract_strided_slice %12 {offsets = [0, 19], sizes = [32, 288], strides = [1, 1]} : vector<32x326xbf16> to vector<32x288xbf16>
    %c4 = arith.constant 4 : index
    %c0_22 = arith.constant 0 : index
    %c0_23 = arith.constant 0 : index
    %33 = vector.load %arg5[%c4, %c0_22, %c0_23] : memref<9x8x32xbf16, #tpu.memory_space<vmem>>, vector<1x8x32xbf16>
    %34 = vector.shape_cast %33 : vector<1x8x32xbf16> to vector<8x32xbf16>
    %cst_24 = arith.constant dense<0.000000e+00> : vector<8x288xf32>
    %35 = tpu.matmul %34, %32, %cst_24 {dimension_numbers = #tpu.dot_dimension_numbers<[1], [0], [0], [1], [0, 0, 1, 1], [], []>} : vector<8x32xbf16>, vector<32x288xbf16>, vector<8x288xf32> -> vector<8x288xf32>
    %36 = arith.addf %31, %35 : vector<8x288xf32>
    %37 = vector.extract_strided_slice %12 {offsets = [0, 20], sizes = [32, 288], strides = [1, 1]} : vector<32x326xbf16> to vector<32x288xbf16>
    %c5 = arith.constant 5 : index
    %c0_25 = arith.constant 0 : index
    %c0_26 = arith.constant 0 : index
    %38 = vector.load %arg5[%c5, %c0_25, %c0_26] : memref<9x8x32xbf16, #tpu.memory_space<vmem>>, vector<1x8x32xbf16>
    %39 = vector.shape_cast %38 : vector<1x8x32xbf16> to vector<8x32xbf16>
    %cst_27 = arith.constant dense<0.000000e+00> : vector<8x288xf32>
    %40 = tpu.matmul %39, %37, %cst_27 {dimension_numbers = #tpu.dot_dimension_numbers<[1], [0], [0], [1], [0, 0, 1, 1], [], []>} : vector<8x32xbf16>, vector<32x288xbf16>, vector<8x288xf32> -> vector<8x288xf32>
    %41 = arith.addf %36, %40 : vector<8x288xf32>
    %42 = vector.extract_strided_slice %12 {offsets = [0, 36], sizes = [32, 288], strides = [1, 1]} : vector<32x326xbf16> to vector<32x288xbf16>
    %c6 = arith.constant 6 : index
    %c0_28 = arith.constant 0 : index
    %c0_29 = arith.constant 0 : index
    %43 = vector.load %arg5[%c6, %c0_28, %c0_29] : memref<9x8x32xbf16, #tpu.memory_space<vmem>>, vector<1x8x32xbf16>
    %44 = vector.shape_cast %43 : vector<1x8x32xbf16> to vector<8x32xbf16>
    %cst_30 = arith.constant dense<0.000000e+00> : vector<8x288xf32>
    %45 = tpu.matmul %44, %42, %cst_30 {dimension_numbers = #tpu.dot_dimension_numbers<[1], [0], [0], [1], [0, 0, 1, 1], [], []>} : vector<8x32xbf16>, vector<32x288xbf16>, vector<8x288xf32> -> vector<8x288xf32>
    %46 = arith.addf %41, %45 : vector<8x288xf32>
    %47 = vector.extract_strided_slice %12 {offsets = [0, 37], sizes = [32, 288], strides = [1, 1]} : vector<32x326xbf16> to vector<32x288xbf16>
    %c7 = arith.constant 7 : index
    %c0_31 = arith.constant 0 : index
    %c0_32 = arith.constant 0 : index
    %48 = vector.load %arg5[%c7, %c0_31, %c0_32] : memref<9x8x32xbf16, #tpu.memory_space<vmem>>, vector<1x8x32xbf16>
    %49 = vector.shape_cast %48 : vector<1x8x32xbf16> to vector<8x32xbf16>
    %cst_33 = arith.constant dense<0.000000e+00> : vector<8x288xf32>
    %50 = tpu.matmul %49, %47, %cst_33 {dimension_numbers = #tpu.dot_dimension_numbers<[1], [0], [0], [1], [0, 0, 1, 1], [], []>} : vector<8x32xbf16>, vector<32x288xbf16>, vector<8x288xf32> -> vector<8x288xf32>
    %51 = arith.addf %46, %50 : vector<8x288xf32>
    %52 = vector.extract_strided_slice %12 {offsets = [0, 38], sizes = [32, 288], strides = [1, 1]} : vector<32x326xbf16> to vector<32x288xbf16>
    %c8 = arith.constant 8 : index
    %c0_34 = arith.constant 0 : index
    %c0_35 = arith.constant 0 : index
    %53 = vector.load %arg5[%c8, %c0_34, %c0_35] : memref<9x8x32xbf16, #tpu.memory_space<vmem>>, vector<1x8x32xbf16>
    %54 = vector.shape_cast %53 : vector<1x8x32xbf16> to vector<8x32xbf16>
    %cst_36 = arith.constant dense<0.000000e+00> : vector<8x288xf32>
    %55 = tpu.matmul %54, %52, %cst_36 {dimension_numbers = #tpu.dot_dimension_numbers<[1], [0], [0], [1], [0, 0, 1, 1], [], []>} : vector<8x32xbf16>, vector<32x288xbf16>, vector<8x288xf32> -> vector<8x288xf32>
    %56 = arith.addf %51, %55 : vector<8x288xf32>
    %c0_37 = arith.constant 0 : index
    %c0_38 = arith.constant 0 : index
    %57 = vector.load %arg6[%c0_37, %c0_38] : memref<8x1xf32, #tpu.memory_space<vmem>>, vector<8x1xf32>
    %58 = vector.broadcast %57 : vector<8x1xf32> to vector<8x288xf32>
    %59 = arith.addf %56, %58 : vector<8x288xf32>
    %cst_39 = arith.constant 0.000000e+00 : f32
    %60 = vector.broadcast %cst_39 : f32 to vector<8x288xf32>
    %61 = arith.maximumf %59, %60 : vector<8x288xf32>
    %c0_40 = arith.constant 0 : index
    %c0_41 = arith.constant 0 : index
    %c0_42 = arith.constant 0 : index
    %62 = vector.load %arg7[%c0_40, %c0_41, %c0_42] : memref<1x8x288xf32, #tpu.memory_space<vmem>>, vector<1x8x288xf32>
    %63 = vector.shape_cast %62 : vector<1x8x288xf32> to vector<8x288xf32>
    %64 = vector.shape_cast %61 : vector<8x288xf32> to vector<1x8x288xf32>
    tpu.vector_store %arg7[%c0_40, %c0_41, %c0_42], %64 {strides = array<i32>} : memref<1x8x288xf32, #tpu.memory_space<vmem>>, vector<1x8x288xf32>,
    return
  }
  func.func @transform_0(%arg0: i32) -> (i32, i32, i32) {
    %c0_i32 = arith.constant 0 : i32
    %c0_i32_0 = arith.constant 0 : i32
    %c0_i32_1 = arith.constant 0 : i32
    return %arg0, %c0_i32, %c0_i32_0 : i32, i32, i32
  }
  func.func @transform_1(%arg0: i32) -> (i32, i32) {
    %c0_i32 = arith.constant 0 : i32
    %c0_i32_0 = arith.constant 0 : i32
    %c0_i32_1 = arith.constant 0 : i32
    return %c0_i32, %c0_i32_0 : i32, i32
  }
  func.func @transform_2(%arg0: i32) -> (i32, i32) {
    %c0_i32 = arith.constant 0 : i32
    %c0_i32_0 = arith.constant 0 : i32
    %c0_i32_1 = arith.constant 0 : i32
    return %c0_i32, %c0_i32_0 : i32, i32
  }
  func.func @transform_3(%arg0: i32) -> (i32, i32) {
    %c0_i32 = arith.constant 0 : i32
    %c0_i32_0 = arith.constant 0 : i32
    %c0_i32_1 = arith.constant 0 : i32
    return %c0_i32, %c0_i32_0 : i32, i32
  }
  func.func @transform_4(%arg0: i32) -> (i32, i32, i32) {
    %c0_i32 = arith.constant 0 : i32
    %c0_i32_0 = arith.constant 0 : i32
    %c0_i32_1 = arith.constant 0 : i32
    %c0_i32_2 = arith.constant 0 : i32
    return %c0_i32, %c0_i32_0, %c0_i32_1 : i32, i32, i32
  }
  func.func @transform_5(%arg0: i32) -> (i32, i32) {
    %c0_i32 = arith.constant 0 : i32
    %c0_i32_0 = arith.constant 0 : i32
    %c0_i32_1 = arith.constant 0 : i32
    return %c0_i32, %c0_i32_0 : i32, i32
  }
  func.func @transform_6(%arg0: i32) -> (i32, i32, i32) {
    %c0_i32 = arith.constant 0 : i32
    %c0_i32_0 = arith.constant 0 : i32
    %c0_i32_1 = arith.constant 0 : i32
    return %arg0, %c0_i32, %c0_i32_0 : i32, i32, i32
  }
}

</mosaic_0001>

<llo_original>
// kernel: denselayer_bc_forward.1
$region0: #{denselayer_bc_forward.1}
  #allocation0 [shape = 'u32[]', space=smem, size = 0x4, offset = 0x4, fixed_abs, tag = 'smem constant byte address 0x4 - core index']
  #allocation1 [shape = 'u32[144,128]{1,0:T(1,128)}', space=vmem, size = 0x12000, scoped, tag = 'internal scratch']
  %s0 = inlined_call_operand.vmem [shape: bf16[2,4,326], index: 0, kind: input, shape index: {}]
  %s1 = inlined_call_operand.vmem [shape: bf16[32,4], index: 1, kind: input, shape index: {}]
  %s2 = inlined_call_operand.vmem [shape: f32[32,1], index: 2, kind: input, shape index: {}]
  %s3 = inlined_call_operand.vmem [shape: f32[1,326], index: 3, kind: input, shape index: {}]
  %s4 = inlined_call_operand.vmem [shape: bf16[9,8,32], index: 4, kind: input, shape index: {}]
  %s5 = inlined_call_operand.vmem [shape: f32[8,1], index: 5, kind: input, shape index: {}]
  %s6 = inlined_call_operand.vmem [shape: f32[2,8,288], index: 6, kind: output, shape index: {}]
  %s7 = sld [smem:[#allocation0]]
  $region57: #{denselayer_bc_forward.1} parent=0
    _
  %s9 = ssub.s32 1, %s7
  %s10 = scalar_select 0, %s9, %s7
  loop: start=0, step=1, limit=4
  $region2: #{denselayer_bc_forward.1} parent=0 // loop_pre_header
    _
  $region3: #{denselayer_bc_forward.1} parent=0 // loop_header
    %s12 = sphi 0, %s16
    %p13 = scmp.ge.s32.totalorder %s12, 4
    %s22 = sphi 0, %s24
    %s25 = sphi 0, %s22
    %s26 = sphi 0, %s25
    %s42 = sphi 0, %s26
    %s46 = sphi 0, %s46
    %s48 = sphi 0, %s46
    %s49 = sphi 0, %s48
    %s63 = sphi 0, %s49
    %s67 = sphi 0, %s67
    %s69 = sphi 0, %s67
    %s70 = sphi 0, %s69
    %s84 = sphi 0, %s70
    %s88 = sphi 0, %s88
    %s90 = sphi 0, %s88
    %s91 = sphi 0, %s90
    %s105 = sphi 0, %s91
    %s109 = sphi 0, %s109
    %s111 = sphi 0, %s109
    %s112 = sphi 0, %s111
    %s126 = sphi 0, %s112
    %s130 = sphi 0, %s130
    %s132 = sphi 0, %s130
    %s133 = sphi 0, %s132
    %s147 = sphi 0, %s133
    %s153 = sphi 0, %s155
    %s156 = sphi 0, %s153
    %s157 = sphi 0, %s156
    %s173 = sphi 0, %s157
  $region4: #{denselayer_bc_forward.1} parent=0 // loop_header_branch
    %15 = sbr.rel (%p13) target = $region8
  $region5: #{denselayer_bc_forward.1} parent=0 // loop_body
    %s17 = ssub.s32 %s12, 1
    %s18 = ssub.s32 %s12, 2
    %s19 = sadd.s32 %s12, 1
    %s20 = ssub.s32 %s12, %s19
    %p21 = scmp.eq.s32.totalorder %s20, 0
    %s23 = sadd.s32 %s22, 1
    %s24 = scalar_select %p21, %s22, %s23
    %p27 = pneg %p21
    %p28 = scmp.eq.s32.totalorder %s12, 1
    %p29 = por %p27, %p28
    %p30 = scmp.ne.s32.totalorder %s22, %s25
    %p31 = scmp.eq.s32.totalorder %s12, 0
    %p32 = por %p30, %p31
    %p33 = scmp.ne.s32.totalorder %s22, %s25
    %p34 = scmp.eq.s32.totalorder %s17, 1
    %p35 = por %p33, %p34
    %p36 = scmp.ne.s32.totalorder %s25, %s26
    %p37 = scmp.eq.s32.totalorder %s17, 0
    %p38 = por %p36, %p37
    %p39 = scmp.ne.s32.totalorder %s25, %s26
    %p40 = scmp.eq.s32.totalorder %s18, 1
    %p41 = por %p39, %p40
    %p43 = scmp.ne.s32.totalorder %s26, %s42
    %p44 = scmp.eq.s32.totalorder %s18, 0
    %p45 = por %p43, %p44
    %s47 = sadd.s32 %s46, 1
    %p50 = scmp.eq.s32.totalorder %s12, 1
    %p51 = scmp.ne.s32.totalorder %s46, %s48
    %p52 = scmp.eq.s32.totalorder %s12, 0
    %p53 = por %p51, %p52
    %p54 = scmp.ne.s32.totalorder %s46, %s48
    %p55 = scmp.eq.s32.totalorder %s17, 1
    %p56 = por %p54, %p55
    %p57 = scmp.ne.s32.totalorder %s48, %s49
    %p58 = scmp.eq.s32.totalorder %s17, 0
    %p59 = por %p57, %p58
    %p60 = scmp.ne.s32.totalorder %s48, %s49
    %p61 = scmp.eq.s32.totalorder %s18, 1
    %p62 = por %p60, %p61
    %p64 = scmp.ne.s32.totalorder %s49, %s63
    %p65 = scmp.eq.s32.totalorder %s18, 0
    %p66 = por %p64, %p65
    %s68 = sadd.s32 %s67, 1
    %p71 = scmp.eq.s32.totalorder %s12, 1
    %p72 = scmp.ne.s32.totalorder %s67, %s69
    %p73 = scmp.eq.s32.totalorder %s12, 0
    %p74 = por %p72, %p73
    %p75 = scmp.ne.s32.totalorder %s67, %s69
    %p76 = scmp.eq.s32.totalorder %s17, 1
    %p77 = por %p75, %p76
    %p78 = scmp.ne.s32.totalorder %s69, %s70
    %p79 = scmp.eq.s32.totalorder %s17, 0
    %p80 = por %p78, %p79
    %p81 = scmp.ne.s32.totalorder %s69, %s70
    %p82 = scmp.eq.s32.totalorder %s18, 1
    %p83 = por %p81, %p82
    %p85 = scmp.ne.s32.totalorder %s70, %s84
    %p86 = scmp.eq.s32.totalorder %s18, 0
    %p87 = por %p85, %p86
    %s89 = sadd.s32 %s88, 1
    %p92 = scmp.eq.s32.totalorder %s12, 1
    %p93 = scmp.ne.s32.totalorder %s88, %s90
    %p94 = scmp.eq.s32.totalorder %s12, 0
    %p95 = por %p93, %p94
    %p96 = scmp.ne.s32.totalorder %s88, %s90
    %p97 = scmp.eq.s32.totalorder %s17, 1
    %p98 = por %p96, %p97
    %p99 = scmp.ne.s32.totalorder %s90, %s91
    %p100 = scmp.eq.s32.totalorder %s17, 0
    %p101 = por %p99, %p100
    %p102 = scmp.ne.s32.totalorder %s90, %s91
    %p103 = scmp.eq.s32.totalorder %s18, 1
    %p104 = por %p102, %p103
    %p106 = scmp.ne.s32.totalorder %s91, %s105
    %p107 = scmp.eq.s32.totalorder %s18, 0
    %p108 = por %p106, %p107
    %s110 = sadd.s32 %s109, 1
    %p113 = scmp.eq.s32.totalorder %s12, 1
    %p114 = scmp.ne.s32.totalorder %s109, %s111
    %p115 = scmp.eq.s32.totalorder %s12, 0
    %p116 = por %p114, %p115
    %p117 = scmp.ne.s32.totalorder %s109, %s111
    %p118 = scmp.eq.s32.totalorder %s17, 1
    %p119 = por %p117, %p118
    %p120 = scmp.ne.s32.totalorder %s111, %s112
    %p121 = scmp.eq.s32.totalorder %s17, 0
    %p122 = por %p120, %p121
    %p123 = scmp.ne.s32.totalorder %s111, %s112
    %p124 = scmp.eq.s32.totalorder %s18, 1
    %p125 = por %p123, %p124
    %p127 = scmp.ne.s32.totalorder %s112, %s126
    %p128 = scmp.eq.s32.totalorder %s18, 0
    %p129 = por %p127, %p128
    %s131 = sadd.s32 %s130, 1
    %p134 = scmp.eq.s32.totalorder %s12, 1
    %p135 = scmp.ne.s32.totalorder %s130, %s132
    %p136 = scmp.eq.s32.totalorder %s12, 0
    %p137 = por %p135, %p136
    %p138 = scmp.ne.s32.totalorder %s130, %s132
    %p139 = scmp.eq.s32.totalorder %s17, 1
    %p140 = por %p138, %p139
    %p141 = scmp.ne.s32.totalorder %s132, %s133
    %p142 = scmp.eq.s32.totalorder %s17, 0
    %p143 = por %p141, %p142
    %p144 = scmp.ne.s32.totalorder %s132, %s133
    %p145 = scmp.eq.s32.totalorder %s18, 1
    %p146 = por %p144, %p145
    %p148 = scmp.ne.s32.totalorder %s133, %s147
    %p149 = scmp.eq.s32.totalorder %s18, 0
    %p150 = por %p148, %p149
    %s151 = ssub.s32 %s12, %s19
    %p152 = scmp.eq.s32.totalorder %s151, 0
    %s154 = sadd.s32 %s153, 1
    %s155 = scalar_select %p152, %s153, %s154
    %p158 = pneg %p152
    %p159 = scmp.eq.s32.totalorder %s12, 1
    %p160 = por %p158, %p159
    %p161 = scmp.ne.s32.totalorder %s153, %s156
    %p162 = scmp.eq.s32.totalorder %s12, 0
    %p163 = por %p161, %p162
    %p164 = scmp.ne.s32.totalorder %s153, %s156
    %p165 = scmp.eq.s32.totalorder %s17, 1
    %p166 = por %p164, %p165
    %p167 = scmp.ne.s32.totalorder %s156, %s157
    %p168 = scmp.eq.s32.totalorder %s17, 0
    %p169 = por %p167, %p168
    %p170 = scmp.ne.s32.totalorder %s156, %s157
    %p171 = scmp.eq.s32.totalorder %s18, 1
    %p172 = por %p170, %p171
    %p174 = scmp.ne.s32.totalorder %s157, %s173
    %p175 = scmp.eq.s32.totalorder %s18, 0
    %p176 = por %p174, %p175
    %p177 = scmp.le.s32.totalorder 1, %s12
    %p178 = scmp.lt.s32.totalorder %s12, 3
    %p179 = pnand %p177, %p178
    %p180 = pneg %p179
    // Predicated region
    $region9: #{denselayer_bc_forward.1} parent=5 // pred_check
      _
    $region10: #{denselayer_bc_forward.1} parent=5 // pred_check_branch
      %182 = sbr.rel (%p179) target = $region12
    $region11: #{denselayer_bc_forward.1} parent=5 // pred_region
      %s183 = ssub.s32 %s12, 1
      // Predicated region
      $region13: #{denselayer_bc_forward.1} parent=11 // pred_check
        %p184 = pneg %p59
      $region14: #{denselayer_bc_forward.1} parent=11 // pred_check_branch
        %186 = sbr.rel (%p184) target = $region16
      $region15: #{denselayer_bc_forward.1} parent=11 // pred_region
        _
      $region16: #{denselayer_bc_forward.1} parent=11 // pred_fallthru
        _
      // Predicated region
      $region17: #{denselayer_bc_forward.1} parent=11 // pred_check
        %p187 = pneg %p80
      $region18: #{denselayer_bc_forward.1} parent=11 // pred_check_branch
        %189 = sbr.rel (%p187) target = $region20
      $region19: #{denselayer_bc_forward.1} parent=11 // pred_region
        _
      $region20: #{denselayer_bc_forward.1} parent=11 // pred_fallthru
        _
      // Predicated region
      $region21: #{denselayer_bc_forward.1} parent=11 // pred_check
        %p190 = pneg %p101
      $region22: #{denselayer_bc_forward.1} parent=11 // pred_check_branch
        %192 = sbr.rel (%p190) target = $region24
      $region23: #{denselayer_bc_forward.1} parent=11 // pred_region
        _
      $region24: #{denselayer_bc_forward.1} parent=11 // pred_fallthru
        _
      // Predicated region
      $region25: #{denselayer_bc_forward.1} parent=11 // pred_check
        %p193 = pneg %p122
      $region26: #{denselayer_bc_forward.1} parent=11 // pred_check_branch
        %195 = sbr.rel (%p193) target = $region28
      $region27: #{denselayer_bc_forward.1} parent=11 // pred_region
        _
      $region28: #{denselayer_bc_forward.1} parent=11 // pred_fallthru
        _
      // Predicated region
      $region29: #{denselayer_bc_forward.1} parent=11 // pred_check
        %p196 = pneg %p143
      $region30: #{denselayer_bc_forward.1} parent=11 // pred_check_branch
        %198 = sbr.rel (%p196) target = $region32
      $region31: #{denselayer_bc_forward.1} parent=11 // pred_region
        _
      $region32: #{denselayer_bc_forward.1} parent=11 // pred_fallthru
        _
    $region12: #{denselayer_bc_forward.1} parent=5 // pred_fallthru
      _
    %p199 = scmp.lt.s32.totalorder %s12, 2
    // Predicated region
    $region33: #{denselayer_bc_forward.1} parent=5 // pred_check
      %p200 = pneg %p199
    $region34: #{denselayer_bc_forward.1} parent=5 // pred_check_branch
      %202 = sbr.rel (%p200) target = $region36
    $region35: #{denselayer_bc_forward.1} parent=5 // pred_region
      // Predicated region
      $region37: #{denselayer_bc_forward.1} parent=35 // pred_check
        %p203 = pneg %p32
      $region38: #{denselayer_bc_forward.1} parent=35 // pred_check_branch
        %205 = sbr.rel (%p203) target = $region40
      $region39: #{denselayer_bc_forward.1} parent=35 // pred_region
        %p206 = scmp.lt.s32.totalorder %s12, 1
        %s207 = scalar_select %p206, %s12, 1
        %s208 = smul.addr %s207, 3
        %s209 = smul.addr %s208, 2
        %s210 = scalar_lea.vmem %s0, %s209
      $region40: #{denselayer_bc_forward.1} parent=35 // pred_fallthru
        _
    $region36: #{denselayer_bc_forward.1} parent=5 // pred_fallthru
      _
    %p211 = scmp.le.s32.totalorder 1, %s12
    %p212 = scmp.lt.s32.totalorder %s12, 3
    %p213 = pnand %p211, %p212
    %p214 = pneg %p213
    // Predicated region
    $region41: #{denselayer_bc_forward.1} parent=5 // pred_check
      _
    $region42: #{denselayer_bc_forward.1} parent=5 // pred_check_branch
      %216 = sbr.rel (%p213) target = $region44
    $region43: #{denselayer_bc_forward.1} parent=5 // pred_region
      %s217 = ssub.s32 %s12, 1
      %p218 = scmp.lt.s32.totalorder %s17, 1
      %s219 = scalar_select %p218, %s17, 1
      %s220 = smul.addr %s219, 3
      %s221 = smul.addr %s220, 2
      %s222 = scalar_lea.vmem %s0, %s221
      %p223 = pneg %p38
      %p224 = pneg %p35
      %p225 = pneg %p59
      %p226 = pneg %p56
      %p227 = pneg %p80
      %p228 = pneg %p77
      %p229 = pneg %p101
      %p230 = pneg %p98
      %p231 = pneg %p122
      %p232 = pneg %p119
      %p233 = pneg %p143
      %p234 = pneg %p140
      %p235 = pneg %p169
      %p236 = pneg %p166
      %p237 = scmp.lt.s32.totalorder %s17, 1
      %s238 = scalar_select %p237, %s17, 1
      %s239 = smul.addr %s238, 3
      %s240 = smul.addr %s239, 8
      %s241 = scalar_lea.vmem %s6, %s240
      %p242 = scmp.lt.s32.totalorder %s17, 1
      %s243 = scalar_select %p242, %s17, 1
      %s244 = smul.addr %s243, 3
      %s245 = smul.addr %s244, 2
      %s246 = scalar_lea.vmem %s0, %s245
      %p247 = scmp.lt.s32.totalorder %s17, 1
      %s248 = scalar_select %p247, %s17, 1
      %s249 = smul.addr %s248, 3
      %s250 = smul.addr %s249, 8
      %s251 = scalar_lea.vmem %s6, %s250
      %v253 = vld [vmem:[%s246] sm:$0x3f]
      %v254 = vld [vmem:[%s1] sm:$0xf]
      %v255 = vld [vmem:[%s1 + $0x4] sm:$0xf]
      %v256 = vld [vmem:[%s1 + $0x8] sm:$0xf]
      %v257 = vld [vmem:[%s1 + $0xc] sm:$0xf]
      %v258 = vld [vmem:[%s2] sm:$0xff]
      %v259 = vld [vmem:[%s2 + $0x8] sm:$0xff]
      %v260 = vld [vmem:[%s2 + $0x10] sm:$0xff]
      %v261 = vld [vmem:[%s2 + $0x18] sm:$0xff]
      %263 = vset.pattern.permute.xlu0 0
      %264 = vperm.xlu0 %263, %v258
      %v265 = vpop.permute.xlu0 %264
      %268 = vset.pattern.permute.xlu0 0
      %269 = vperm.xlu0 %268, %v259
      %v270 = vpop.permute.xlu0 %269
      %273 = vset.pattern.permute.xlu0 0
      %274 = vperm.xlu0 %273, %v260
      %v275 = vpop.permute.xlu0 %274
      %278 = vset.pattern.permute.xlu0 0
      %279 = vperm.xlu0 %278, %v261
      %v280 = vpop.permute.xlu0 %279
      %v286 = vunpack.c.l.b16 %v254
      %v287 = vunpack.c.l.b16 %v255
      %v288 = vunpack.c.l.b16 %v256
      %v289 = vunpack.c.l.b16 %v257
      %v290 = vpack.c.b16 %v287, %v286
      %v291 = vpack.c.b16 %v289, %v288
      %v293 = vcombine.high %v253, %v253
      %v295 = vunpack.c.l.s4 1983009808
      %v296 = vunpack.c.0.s8 %v295
      %v297 = vlaneseq
      %v298 = vshrl.u32 %v297, 7
      %v299 = vsub.s32 %v296, %v298
      %v300 = vrot.slane %v253, %v299
      %v302 = vunpack.c.l.s4 1983009808
      %v303 = vunpack.c.0.s8 %v302
      %v304 = vlaneseq
      %v305 = vshrl.u32 %v304, 7
      %v306 = vsub.s32 %v303, %v305
      %v307 = vrot.slane %v293, %v306
      %v308 = vcombine.high %v300, %v300
      %vm309 = vcmask 31744
      %v311 = vsel %vm309, %v290, 0
      %v314 = vsel %vm309, %v291, 0
      %vm316 = vcmask 1041408
      %v318 = vsel %vm316, %v300, 0
      %v321 = vsel %vm316, %v308, 0
      %v324 = vsel %vm316, %v307, 0
      %326 = vmatprep.subr.bf16.mxu0 %v321
      %327 = vmatpush1.bf16.msra.mxu0 %v318
      %328 = vmatprep.subr.bf16.mxu0 0
      %329 = vmatpush1.bf16.msra.mxu0 0
      %330 = vmatprep.subr.bf16.mxu0 0
      %331 = vmatpush1.bf16.msra.mxu0 0
      %332 = vmatprep.subr.bf16.mxu0 0
      %333 = vmatpush1.bf16.msra.mxu0 0
      %334 = vmatprep.subr.bf16.mxu0 0
      %335 = vmatpush1.bf16.msra.mxu0 0
      %336 = vmatprep.subr.bf16.mxu0 0
      %337 = vmatpush1.bf16.msra.mxu0 0
      %338 = vmatprep.subr.bf16.mxu0 0
      %339 = vmatpush1.bf16.msra.mxu0 0
      %340 = vmatprep.subr.bf16.mxu0 0
      %341 = vmatpush1.bf16.msra.mxu0 0
      %342 = vmatprep.subr.bf16.mxu0 0
      %343 = vmatpush1.bf16.msra.mxu0 0
      %344 = vmatprep.subr.bf16.mxu0 0
      %345 = vmatpush1.bf16.msra.mxu0 0
      %346 = vmatprep.subr.bf16.mxu0 0
      %347 = vmatpush1.bf16.msra.mxu0 0
      %348 = vmatprep.subr.bf16.mxu0 0
      %349 = vmatpush1.bf16.msra.mxu0 0
      %350 = vmatprep.subr.bf16.mxu0 0
      %351 = vmatpush1.bf16.msra.mxu0 0
      %352 = vmatprep.subr.bf16.mxu0 0
      %353 = vmatpush1.bf16.msra.mxu0 0
      %354 = vmatprep.subr.bf16.mxu0 0
      %355 = vmatpush1.bf16.msra.mxu0 0
      %356 = vmatprep.subr.bf16.mxu0 0
      %357 = vmatpush1.bf16.msra.mxu0 0
      %358 = vmatprep.mubr.bf16.mxu0 0
      %359 = vmatmul.mubr.bf16.gmra.mrb[0].mxu0 %v311
      %v360 = vpop.f32.mrb[0].mxu0
      %v361 = vadd.f32 %v265, %v360
      %v362 = vpop.f32.mrb[0].mxu0
      %v363 = vadd.f32 %v265, %v362
      %v364 = vpop.f32.mrb[0].mxu0
      %v365 = vadd.f32 %v270, %v364
      %v366 = vpop.f32.mrb[0].mxu0
      %v367 = vadd.f32 %v270, %v366
      %368 = vmatprep.mubr.bf16.mxu0 0
      %369 = vmatmul.mubr.bf16.gmra.mrb[0].mxu0 %v314
      %v370 = vpop.f32.mrb[0].mxu0
      %v371 = vadd.f32 %v275, %v370
      %v372 = vpop.f32.mrb[0].mxu0
      %v373 = vadd.f32 %v275, %v372
      %v374 = vpop.f32.mrb[0].mxu0
      %v375 = vadd.f32 %v280, %v374
      %v376 = vpop.f32.mrb[0].mxu0
      %v377 = vadd.f32 %v280, %v376
      %378 = vdwg.mxu0
      %379 = vmatprep.subr.bf16.mxu0 0
      %380 = vmatpush1.bf16.msra.mxu0 %v324
      %381 = vmatprep.subr.bf16.mxu0 0
      %382 = vmatpush1.bf16.msra.mxu0 0
      %383 = vmatprep.subr.bf16.mxu0 0
      %384 = vmatpush1.bf16.msra.mxu0 0
      %385 = vmatprep.subr.bf16.mxu0 0
      %386 = vmatpush1.bf16.msra.mxu0 0
      %387 = vmatprep.subr.bf16.mxu0 0
      %388 = vmatpush1.bf16.msra.mxu0 0
      %389 = vmatprep.subr.bf16.mxu0 0
      %390 = vmatpush1.bf16.msra.mxu0 0
      %391 = vmatprep.subr.bf16.mxu0 0
      %392 = vmatpush1.bf16.msra.mxu0 0
      %393 = vmatprep.subr.bf16.mxu0 0
      %394 = vmatpush1.bf16.msra.mxu0 0
      %395 = vmatprep.subr.bf16.mxu0 0
      %396 = vmatpush1.bf16.msra.mxu0 0
      %397 = vmatprep.subr.bf16.mxu0 0
      %398 = vmatpush1.bf16.msra.mxu0 0
      %399 = vmatprep.subr.bf16.mxu0 0
      %400 = vmatpush1.bf16.msra.mxu0 0
      %401 = vmatprep.subr.bf16.mxu0 0
      %402 = vmatpush1.bf16.msra.mxu0 0
      %403 = vmatprep.subr.bf16.mxu0 0
      %404 = vmatpush1.bf16.msra.mxu0 0
      %405 = vmatprep.subr.bf16.mxu0 0
      %406 = vmatpush1.bf16.msra.mxu0 0
      %407 = vmatprep.subr.bf16.mxu0 0
      %408 = vmatpush1.bf16.msra.mxu0 0
      %409 = vmatprep.subr.bf16.mxu0 0
      %410 = vmatpush1.bf16.msra.mxu0 0
      %411 = vmatprep.mubr.bf16.mxu0 0
      %412 = vmatmul.mubr.bf16.gmra.mrb[0].mxu0 %v311
      %v413 = vpop.f32.mrb[0].mxu0
      %v414 = vadd.f32 %v265, %v413
      %v415 = vpop.f32.mrb[0].mxu0
      %v416 = vpop.f32.mrb[0].mxu0
      %v417 = vadd.f32 %v270, %v416
      %v418 = vpop.f32.mrb[0].mxu0
      %419 = vmatprep.mubr.bf16.mxu0 0
      %420 = vmatmul.mubr.bf16.gmra.mrb[0].mxu0 %v314
      %v421 = vpop.f32.mrb[0].mxu0
      %v422 = vadd.f32 %v275, %v421
      %v423 = vpop.f32.mrb[0].mxu0
      %v424 = vpop.f32.mrb[0].mxu0
      %v425 = vadd.f32 %v280, %v424
      %v426 = vpop.f32.mrb[0].mxu0
      %427 = vdwg.mxu0
      %v428 = vmax.f32 %v361, 0.0
      %v429 = vmax.f32 %v363, 0.0
      %v430 = vmax.f32 %v414, 0.0
      %v431 = vmax.f32 %v365, 0.0
      %v432 = vmax.f32 %v367, 0.0
      %v433 = vmax.f32 %v417, 0.0
      %v434 = vmax.f32 %v371, 0.0
      %v435 = vmax.f32 %v373, 0.0
      %v436 = vmax.f32 %v422, 0.0
      %v437 = vmax.f32 %v375, 0.0
      %v438 = vmax.f32 %v377, 0.0
      %v439 = vmax.f32 %v425, 0.0
      %v440 = vld [vmem:[%s3] sm:$0x7]
      %v442 = vlaneseq
      %v443 = vshrl.u32 %v442, 7
      %v444 = vsub.s32 0, %v443
      %v445 = vrot.slane %v440, %v444
      %v446 = vlaneseq
      %v447 = vshrl.u32 %v446, 7
      %v448 = vsub.s32 1, %v447
      %v449 = vrot.slane %v440, %v448
      %v450 = vlaneseq
      %v451 = vshrl.u32 %v450, 7
      %v452 = vsub.s32 2, %v451
      %v453 = vrot.slane %v440, %v452
      %v457 = vmul.f32 %v428, %v445
      %v458 = vmul.f32 %v429, %v449
      %v459 = vmul.f32 %v430, %v453
      %v460 = vmul.f32 %v431, %v445
      %v461 = vmul.f32 %v432, %v449
      %v462 = vmul.f32 %v433, %v453
      %v463 = vmul.f32 %v434, %v445
      %v464 = vmul.f32 %v435, %v449
      %v465 = vmul.f32 %v436, %v453
      %v466 = vmul.f32 %v437, %v445
      %v467 = vmul.f32 %v438, %v449
      %v468 = vmul.f32 %v439, %v453
      %v469 = vpack.c.bf16 %v460, %v457
      %v470 = vpack.c.bf16 %v461, %v458
      %v471 = vpack.c.bf16 %v462, %v459
      %v472 = vpack.c.bf16 %v466, %v463
      %v473 = vpack.c.bf16 %v467, %v464
      %v474 = vpack.c.bf16 %v468, %v465
      %v475 = vld [vmem:[%s4] sm:$0xf]
      %s476 = scalar_lea.vmem %s4, 4
      %v477 = vld [vmem:[%s476] sm:$0xf]
      %484 = vrot.lane.b32.xlu0 %v469, 127
      %v485 = vpop.permute.xlu0 %484
      %486 = vrot.lane.b32.xlu0 %v470, 127
      %v487 = vpop.permute.xlu0 %486
      %488 = vrot.lane.b32.xlu0 %v471, 127
      %v489 = vpop.permute.xlu0 %488
      %490 = vrot.lane.b32.xlu0 %v472, 127
      %v491 = vpop.permute.xlu0 %490
      %492 = vrot.lane.b32.xlu0 %v473, 127
      %v493 = vpop.permute.xlu0 %492
      %494 = vrot.lane.b32.xlu0 %v474, 127
      %v495 = vpop.permute.xlu0 %494
      %vm496 = vcmask 1039360
      %v497 = vsel %vm496, %v485, %v487
      %v498 = vsel %vm496, %v487, %v489
      %v499 = vsel %vm496, %v491, %v493
      %v500 = vsel %vm496, %v493, %v495
      %vm507 = vcmask 261120
      %v509 = vsel %vm507, %v477, 0
      %511 = vmatprep.subr.bf16.mxu0 %v498
      %512 = vmatpush1.bf16.msra.mxu0 %v497
      %513 = vmatprep.subr.bf16.mxu0 %v500
      %514 = vmatpush1.bf16.msra.mxu0 %v499
      %515 = vmatprep.subr.bf16.mxu0 0
      %516 = vmatpush1.bf16.msra.mxu0 0
      %517 = vmatprep.subr.bf16.mxu0 0
      %518 = vmatpush1.bf16.msra.mxu0 0
      %519 = vmatprep.subr.bf16.mxu0 0
      %520 = vmatpush1.bf16.msra.mxu0 0
      %521 = vmatprep.subr.bf16.mxu0 0
      %522 = vmatpush1.bf16.msra.mxu0 0
      %523 = vmatprep.subr.bf16.mxu0 0
      %524 = vmatpush1.bf16.msra.mxu0 0
      %525 = vmatprep.subr.bf16.mxu0 0
      %526 = vmatpush1.bf16.msra.mxu0 0
      %527 = vmatprep.subr.bf16.mxu0 0
      %528 = vmatpush1.bf16.msra.mxu0 0
      %529 = vmatprep.subr.bf16.mxu0 0
      %530 = vmatpush1.bf16.msra.mxu0 0
      %531 = vmatprep.subr.bf16.mxu0 0
      %532 = vmatpush1.bf16.msra.mxu0 0
      %533 = vmatprep.subr.bf16.mxu0 0
      %534 = vmatpush1.bf16.msra.mxu0 0
      %535 = vmatprep.subr.bf16.mxu0 0
      %536 = vmatpush1.bf16.msra.mxu0 0
      %537 = vmatprep.subr.bf16.mxu0 0
      %538 = vmatpush1.bf16.msra.mxu0 0
      %539 = vmatprep.subr.bf16.mxu0 0
      %540 = vmatpush1.bf16.msra.mxu0 0
      %541 = vmatprep.subr.bf16.mxu0 0
      %542 = vmatpush1.bf16.msra.mxu0 0
      %543 = vmatprep.mubr.bf16.mxu0 0
      %544 = vmatmul.mubr.bf16.gmra.mrb[0].mxu0 %v509
      %v545 = vpop.f32.mrb[0].mxu0
      %v546 = vadd.f32 0.0, %v545
      %v547 = vpop.f32.mrb[0].mxu0
      %v548 = vadd.f32 0.0, %v547
      %v549 = vpop.f32.mrb[0].mxu0
      %v550 = vpop.f32.mrb[0].mxu0
      %551 = vdwg.mxu0
      %552 = vmatprep.subr.bf16.mxu0 0
      %553 = vmatpush1.bf16.msra.mxu0 %v489
      %554 = vmatprep.subr.bf16.mxu0 0
      %555 = vmatpush1.bf16.msra.mxu0 %v495
      %556 = vmatprep.subr.bf16.mxu0 0
      %557 = vmatpush1.bf16.msra.mxu0 0
      %558 = vmatprep.subr.bf16.mxu0 0
      %559 = vmatpush1.bf16.msra.mxu0 0
      %560 = vmatprep.subr.bf16.mxu0 0
      %561 = vmatpush1.bf16.msra.mxu0 0
      %562 = vmatprep.subr.bf16.mxu0 0
      %563 = vmatpush1.bf16.msra.mxu0 0
      %564 = vmatprep.subr.bf16.mxu0 0
      %565 = vmatpush1.bf16.msra.mxu0 0
      %566 = vmatprep.subr.bf16.mxu0 0
      %567 = vmatpush1.bf16.msra.mxu0 0
      %568 = vmatprep.subr.bf16.mxu0 0
      %569 = vmatpush1.bf16.msra.mxu0 0
      %570 = vmatprep.subr.bf16.mxu0 0
      %571 = vmatpush1.bf16.msra.mxu0 0
      %572 = vmatprep.subr.bf16.mxu0 0
      %573 = vmatpush1.bf16.msra.mxu0 0
      %574 = vmatprep.subr.bf16.mxu0 0
      %575 = vmatpush1.bf16.msra.mxu0 0
      %576 = vmatprep.subr.bf16.mxu0 0
      %577 = vmatpush1.bf16.msra.mxu0 0
      %578 = vmatprep.subr.bf16.mxu0 0
      %579 = vmatpush1.bf16.msra.mxu0 0
      %580 = vmatprep.subr.bf16.mxu0 0
      %581 = vmatpush1.bf16.msra.mxu0 0
      %582 = vmatprep.subr.bf16.mxu0 0
      %583 = vmatpush1.bf16.msra.mxu0 0
      %584 = vmatprep.mubr.bf16.mxu0 0
      %585 = vmatmul.mubr.bf16.gmra.mrb[0].mxu0 %v509
      %v586 = vpop.f32.mrb[0].mxu0
      %v587 = vadd.f32 0.0, %v586
      %v588 = vpop.f32.mrb[0].mxu0
      %v589 = vpop.f32.mrb[0].mxu0
      %v590 = vpop.f32.mrb[0].mxu0
      %591 = vdwg.mxu0
      %v593 = vsel %vm507, %v475, 0
      %595 = vmatprep.subr.bf16.mxu0 %v470
      %596 = vmatpush1.bf16.msra.mxu0 %v469
      %597 = vmatprep.subr.bf16.mxu0 %v473
      %598 = vmatpush1.bf16.msra.mxu0 %v472
      %599 = vmatprep.subr.bf16.mxu0 0
      %600 = vmatpush1.bf16.msra.mxu0 0
      %601 = vmatprep.subr.bf16.mxu0 0
      %602 = vmatpush1.bf16.msra.mxu0 0
      %603 = vmatprep.subr.bf16.mxu0 0
      %604 = vmatpush1.bf16.msra.mxu0 0
      %605 = vmatprep.subr.bf16.mxu0 0
      %606 = vmatpush1.bf16.msra.mxu0 0
      %607 = vmatprep.subr.bf16.mxu0 0
      %608 = vmatpush1.bf16.msra.mxu0 0
      %609 = vmatprep.subr.bf16.mxu0 0
      %610 = vmatpush1.bf16.msra.mxu0 0
      %611 = vmatprep.subr.bf16.mxu0 0
      %612 = vmatpush1.bf16.msra.mxu0 0
      %613 = vmatprep.subr.bf16.mxu0 0
      %614 = vmatpush1.bf16.msra.mxu0 0
      %615 = vmatprep.subr.bf16.mxu0 0
      %616 = vmatpush1.bf16.msra.mxu0 0
      %617 = vmatprep.subr.bf16.mxu0 0
      %618 = vmatpush1.bf16.msra.mxu0 0
      %619 = vmatprep.subr.bf16.mxu0 0
      %620 = vmatpush1.bf16.msra.mxu0 0
      %621 = vmatprep.subr.bf16.mxu0 0
      %622 = vmatpush1.bf16.msra.mxu0 0
      %623 = vmatprep.subr.bf16.mxu0 0
      %624 = vmatpush1.bf16.msra.mxu0 0
      %625 = vmatprep.subr.bf16.mxu0 0
      %626 = vmatpush1.bf16.msra.mxu0 0
      %627 = vmatprep.mubr.bf16.mxu0 0
      %628 = vmatmul.mubr.bf16.gmra.mrb[0].mxu0 %v593
      %v629 = vpop.f32.mrb[0].mxu0
      %v630 = vadd.f32 %v546, %v629
      %v631 = vpop.f32.mrb[0].mxu0
      %v632 = vadd.f32 %v548, %v631
      %v633 = vpop.f32.mrb[0].mxu0
      %v634 = vpop.f32.mrb[0].mxu0
      %635 = vdwg.mxu0
      %636 = vmatprep.subr.bf16.mxu0 0
      %637 = vmatpush1.bf16.msra.mxu0 %v471
      %638 = vmatprep.subr.bf16.mxu0 0
      %639 = vmatpush1.bf16.msra.mxu0 %v474
      %640 = vmatprep.subr.bf16.mxu0 0
      %641 = vmatpush1.bf16.msra.mxu0 0
      %642 = vmatprep.subr.bf16.mxu0 0
      %643 = vmatpush1.bf16.msra.mxu0 0
      %644 = vmatprep.subr.bf16.mxu0 0
      %645 = vmatpush1.bf16.msra.mxu0 0
      %646 = vmatprep.subr.bf16.mxu0 0
      %647 = vmatpush1.bf16.msra.mxu0 0
      %648 = vmatprep.subr.bf16.mxu0 0
      %649 = vmatpush1.bf16.msra.mxu0 0
      %650 = vmatprep.subr.bf16.mxu0 0
      %651 = vmatpush1.bf16.msra.mxu0 0
      %652 = vmatprep.subr.bf16.mxu0 0
      %653 = vmatpush1.bf16.msra.mxu0 0
      %654 = vmatprep.subr.bf16.mxu0 0
      %655 = vmatpush1.bf16.msra.mxu0 0
      %656 = vmatprep.subr.bf16.mxu0 0
      %657 = vmatpush1.bf16.msra.mxu0 0
      %658 = vmatprep.subr.bf16.mxu0 0
      %659 = vmatpush1.bf16.msra.mxu0 0
      %660 = vmatprep.subr.bf16.mxu0 0
      %661 = vmatpush1.bf16.msra.mxu0 0
      %662 = vmatprep.subr.bf16.mxu0 0
      %663 = vmatpush1.bf16.msra.mxu0 0
      %664 = vmatprep.subr.bf16.mxu0 0
      %665 = vmatpush1.bf16.msra.mxu0 0
      %666 = vmatprep.subr.bf16.mxu0 0
      %667 = vmatpush1.bf16.msra.mxu0 0
      %668 = vmatprep.mubr.bf16.mxu0 0
      %669 = vmatmul.mubr.bf16.gmra.mrb[0].mxu0 %v593
      %v670 = vpop.f32.mrb[0].mxu0
      %v671 = vadd.f32 %v587, %v670
      %v672 = vpop.f32.mrb[0].mxu0
      %v673 = vpop.f32.mrb[0].mxu0
      %v674 = vpop.f32.mrb[0].mxu0
      %675 = vdwg.mxu0
      %s676 = scalar_lea.vmem %s4, 8
      %v677 = vld [vmem:[%s676] sm:$0xf]
      %678 = vrot.lane.b32.xlu0 %v469, 126
      %v679 = vpop.permute.xlu0 %678
      %680 = vrot.lane.b32.xlu0 %v470, 126
      %v681 = vpop.permute.xlu0 %680
      %682 = vrot.lane.b32.xlu0 %v471, 126
      %v683 = vpop.permute.xlu0 %682
      %684 = vrot.lane.b32.xlu0 %v472, 126
      %v685 = vpop.permute.xlu0 %684
      %686 = vrot.lane.b32.xlu0 %v473, 126
      %v687 = vpop.permute.xlu0 %686
      %688 = vrot.lane.b32.xlu0 %v474, 126
      %v689 = vpop.permute.xlu0 %688
      %vm690 = vcmask 1031168
      %v691 = vsel %vm690, %v679, %v681
      %v692 = vsel %vm690, %v681, %v683
      %v693 = vsel %vm690, %v685, %v687
      %v694 = vsel %vm690, %v687, %v689
      %v702 = vsel %vm507, %v677, 0
      %704 = vmatprep.subr.bf16.mxu0 %v692
      %705 = vmatpush1.bf16.msra.mxu0 %v691
      %706 = vmatprep.subr.bf16.mxu0 %v694
      %707 = vmatpush1.bf16.msra.mxu0 %v693
      %708 = vmatprep.subr.bf16.mxu0 0
      %709 = vmatpush1.bf16.msra.mxu0 0
      %710 = vmatprep.subr.bf16.mxu0 0
      %711 = vmatpush1.bf16.msra.mxu0 0
      %712 = vmatprep.subr.bf16.mxu0 0
      %713 = vmatpush1.bf16.msra.mxu0 0
      %714 = vmatprep.subr.bf16.mxu0 0
      %715 = vmatpush1.bf16.msra.mxu0 0
      %716 = vmatprep.subr.bf16.mxu0 0
      %717 = vmatpush1.bf16.msra.mxu0 0
      %718 = vmatprep.subr.bf16.mxu0 0
      %719 = vmatpush1.bf16.msra.mxu0 0
      %720 = vmatprep.subr.bf16.mxu0 0
      %721 = vmatpush1.bf16.msra.mxu0 0
      %722 = vmatprep.subr.bf16.mxu0 0
      %723 = vmatpush1.bf16.msra.mxu0 0
      %724 = vmatprep.subr.bf16.mxu0 0
      %725 = vmatpush1.bf16.msra.mxu0 0
      %726 = vmatprep.subr.bf16.mxu0 0
      %727 = vmatpush1.bf16.msra.mxu0 0
      %728 = vmatprep.subr.bf16.mxu0 0
      %729 = vmatpush1.bf16.msra.mxu0 0
      %730 = vmatprep.subr.bf16.mxu0 0
      %731 = vmatpush1.bf16.msra.mxu0 0
      %732 = vmatprep.subr.bf16.mxu0 0
      %733 = vmatpush1.bf16.msra.mxu0 0
      %734 = vmatprep.subr.bf16.mxu0 0
      %735 = vmatpush1.bf16.msra.mxu0 0
      %736 = vmatprep.mubr.bf16.mxu0 0
      %737 = vmatmul.mubr.bf16.gmra.mrb[0].mxu0 %v702
      %v738 = vpop.f32.mrb[0].mxu0
      %v739 = vadd.f32 0.0, %v738
      %v740 = vpop.f32.mrb[0].mxu0
      %v741 = vadd.f32 0.0, %v740
      %v742 = vpop.f32.mrb[0].mxu0
      %v743 = vpop.f32.mrb[0].mxu0
      %744 = vdwg.mxu0
      %745 = vmatprep.subr.bf16.mxu0 0
      %746 = vmatpush1.bf16.msra.mxu0 %v683
      %747 = vmatprep.subr.bf16.mxu0 0
      %748 = vmatpush1.bf16.msra.mxu0 %v689
      %749 = vmatprep.subr.bf16.mxu0 0
      %750 = vmatpush1.bf16.msra.mxu0 0
      %751 = vmatprep.subr.bf16.mxu0 0
      %752 = vmatpush1.bf16.msra.mxu0 0
      %753 = vmatprep.subr.bf16.mxu0 0
      %754 = vmatpush1.bf16.msra.mxu0 0
      %755 = vmatprep.subr.bf16.mxu0 0
      %756 = vmatpush1.bf16.msra.mxu0 0
      %757 = vmatprep.subr.bf16.mxu0 0
      %758 = vmatpush1.bf16.msra.mxu0 0
      %759 = vmatprep.subr.bf16.mxu0 0
      %760 = vmatpush1.bf16.msra.mxu0 0
      %761 = vmatprep.subr.bf16.mxu0 0
      %762 = vmatpush1.bf16.msra.mxu0 0
      %763 = vmatprep.subr.bf16.mxu0 0
      %764 = vmatpush1.bf16.msra.mxu0 0
      %765 = vmatprep.subr.bf16.mxu0 0
      %766 = vmatpush1.bf16.msra.mxu0 0
      %767 = vmatprep.subr.bf16.mxu0 0
      %768 = vmatpush1.bf16.msra.mxu0 0
      %769 = vmatprep.subr.bf16.mxu0 0
      %770 = vmatpush1.bf16.msra.mxu0 0
      %771 = vmatprep.subr.bf16.mxu0 0
      %772 = vmatpush1.bf16.msra.mxu0 0
      %773 = vmatprep.subr.bf16.mxu0 0
      %774 = vmatpush1.bf16.msra.mxu0 0
      %775 = vmatprep.subr.bf16.mxu0 0
      %776 = vmatpush1.bf16.msra.mxu0 0
      %777 = vmatprep.mubr.bf16.mxu0 0
      %778 = vmatmul.mubr.bf16.gmra.mrb[0].mxu0 %v702
      %v779 = vpop.f32.mrb[0].mxu0
      %v780 = vadd.f32 0.0, %v779
      %v781 = vpop.f32.mrb[0].mxu0
      %v782 = vpop.f32.mrb[0].mxu0
      %v783 = vpop.f32.mrb[0].mxu0
      %784 = vdwg.mxu0
      %v785 = vadd.f32 %v630, %v739
      %v786 = vadd.f32 %v632, %v741
      %v787 = vadd.f32 %v671, %v780
      %s788 = scalar_lea.vmem %s4, 12
      %v789 = vld [vmem:[%s788] sm:$0xf]
      %790 = vrot.lane.b32.xlu0 %v469, 110
      %v791 = vpop.permute.xlu0 %790
      %792 = vrot.lane.b32.xlu0 %v470, 110
      %v793 = vpop.permute.xlu0 %792
      %794 = vrot.lane.b32.xlu0 %v471, 110
      %v795 = vpop.permute.xlu0 %794
      %796 = vrot.lane.b32.xlu0 %v472, 110
      %v797 = vpop.permute.xlu0 %796
      %798 = vrot.lane.b32.xlu0 %v473, 110
      %v799 = vpop.permute.xlu0 %798
      %800 = vrot.lane.b32.xlu0 %v474, 110
      %v801 = vpop.permute.xlu0 %800
      %vm802 = vcmask 900096
      %v803 = vsel %vm802, %v791, %v793
      %v804 = vsel %vm802, %v793, %v795
      %v805 = vsel %vm802, %v797, %v799
      %v806 = vsel %vm802, %v799, %v801
      %v814 = vsel %vm507, %v789, 0
      %816 = vmatprep.subr.bf16.mxu0 %v804
      %817 = vmatpush1.bf16.msra.mxu0 %v803
      %818 = vmatprep.subr.bf16.mxu0 %v806
      %819 = vmatpush1.bf16.msra.mxu0 %v805
      %820 = vmatprep.subr.bf16.mxu0 0
      %821 = vmatpush1.bf16.msra.mxu0 0
      %822 = vmatprep.subr.bf16.mxu0 0
      %823 = vmatpush1.bf16.msra.mxu0 0
      %824 = vmatprep.subr.bf16.mxu0 0
      %825 = vmatpush1.bf16.msra.mxu0 0
      %826 = vmatprep.subr.bf16.mxu0 0
      %827 = vmatpush1.bf16.msra.mxu0 0
      %828 = vmatprep.subr.bf16.mxu0 0
      %829 = vmatpush1.bf16.msra.mxu0 0
      %830 = vmatprep.subr.bf16.mxu0 0
      %831 = vmatpush1.bf16.msra.mxu0 0
      %832 = vmatprep.subr.bf16.mxu0 0
      %833 = vmatpush1.bf16.msra.mxu0 0
      %834 = vmatprep.subr.bf16.mxu0 0
      %835 = vmatpush1.bf16.msra.mxu0 0
      %836 = vmatprep.subr.bf16.mxu0 0
      %837 = vmatpush1.bf16.msra.mxu0 0
      %838 = vmatprep.subr.bf16.mxu0 0
      %839 = vmatpush1.bf16.msra.mxu0 0
      %840 = vmatprep.subr.bf16.mxu0 0
      %841 = vmatpush1.bf16.msra.mxu0 0
      %842 = vmatprep.subr.bf16.mxu0 0
      %843 = vmatpush1.bf16.msra.mxu0 0
      %844 = vmatprep.subr.bf16.mxu0 0
      %845 = vmatpush1.bf16.msra.mxu0 0
      %846 = vmatprep.subr.bf16.mxu0 0
      %847 = vmatpush1.bf16.msra.mxu0 0
      %848 = vmatprep.mubr.bf16.mxu0 0
      %849 = vmatmul.mubr.bf16.gmra.mrb[0].mxu0 %v814
      %v850 = vpop.f32.mrb[0].mxu0
      %v851 = vadd.f32 0.0, %v850
      %v852 = vpop.f32.mrb[0].mxu0
      %v853 = vadd.f32 0.0, %v852
      %v854 = vpop.f32.mrb[0].mxu0
      %v855 = vpop.f32.mrb[0].mxu0
      %856 = vdwg.mxu0
      %857 = vmatprep.subr.bf16.mxu0 0
      %858 = vmatpush1.bf16.msra.mxu0 %v795
      %859 = vmatprep.subr.bf16.mxu0 0
      %860 = vmatpush1.bf16.msra.mxu0 %v801
      %861 = vmatprep.subr.bf16.mxu0 0
      %862 = vmatpush1.bf16.msra.mxu0 0
      %863 = vmatprep.subr.bf16.mxu0 0
      %864 = vmatpush1.bf16.msra.mxu0 0
      %865 = vmatprep.subr.bf16.mxu0 0
      %866 = vmatpush1.bf16.msra.mxu0 0
      %867 = vmatprep.subr.bf16.mxu0 0
      %868 = vmatpush1.bf16.msra.mxu0 0
      %869 = vmatprep.subr.bf16.mxu0 0
      %870 = vmatpush1.bf16.msra.mxu0 0
      %871 = vmatprep.subr.bf16.mxu0 0
      %872 = vmatpush1.bf16.msra.mxu0 0
      %873 = vmatprep.subr.bf16.mxu0 0
      %874 = vmatpush1.bf16.msra.mxu0 0
      %875 = vmatprep.subr.bf16.mxu0 0
      %876 = vmatpush1.bf16.msra.mxu0 0
      %877 = vmatprep.subr.bf16.mxu0 0
      %878 = vmatpush1.bf16.msra.mxu0 0
      %879 = vmatprep.subr.bf16.mxu0 0
      %880 = vmatpush1.bf16.msra.mxu0 0
      %881 = vmatprep.subr.bf16.mxu0 0
      %882 = vmatpush1.bf16.msra.mxu0 0
      %883 = vmatprep.subr.bf16.mxu0 0
      %884 = vmatpush1.bf16.msra.mxu0 0
      %885 = vmatprep.subr.bf16.mxu0 0
      %886 = vmatpush1.bf16.msra.mxu0 0
      %887 = vmatprep.subr.bf16.mxu0 0
      %888 = vmatpush1.bf16.msra.mxu0 0
      %889 = vmatprep.mubr.bf16.mxu0 0
      %890 = vmatmul.mubr.bf16.gmra.mrb[0].mxu0 %v814
      %v891 = vpop.f32.mrb[0].mxu0
      %v892 = vadd.f32 0.0, %v891
      %v893 = vpop.f32.mrb[0].mxu0
      %v894 = vpop.f32.mrb[0].mxu0
      %v895 = vpop.f32.mrb[0].mxu0
      %896 = vdwg.mxu0
      %v897 = vadd.f32 %v785, %v851
      %v898 = vadd.f32 %v786, %v853
      %v899 = vadd.f32 %v787, %v892
      %s900 = scalar_lea.vmem %s4, 16
      %v901 = vld [vmem:[%s900] sm:$0xf]
      %902 = vrot.lane.b32.xlu0 %v469, 109
      %v903 = vpop.permute.xlu0 %902
      %904 = vrot.lane.b32.xlu0 %v470, 109
      %v905 = vpop.permute.xlu0 %904
      %906 = vrot.lane.b32.xlu0 %v471, 109
      %v907 = vpop.permute.xlu0 %906
      %908 = vrot.lane.b32.xlu0 %v472, 109
      %v909 = vpop.permute.xlu0 %908
      %910 = vrot.lane.b32.xlu0 %v473, 109
      %v911 = vpop.permute.xlu0 %910
      %912 = vrot.lane.b32.xlu0 %v474, 109
      %v913 = vpop.permute.xlu0 %912
      %vm914 = vcmask 891904
      %v915 = vsel %vm914, %v903, %v905
      %v916 = vsel %vm914, %v905, %v907
      %v917 = vsel %vm914, %v909, %v911
      %v918 = vsel %vm914, %v911, %v913
      %v926 = vsel %vm507, %v901, 0
      %928 = vmatprep.subr.bf16.mxu0 %v916
      %929 = vmatpush1.bf16.msra.mxu0 %v915
      %930 = vmatprep.subr.bf16.mxu0 %v918
      %931 = vmatpush1.bf16.msra.mxu0 %v917
      %932 = vmatprep.subr.bf16.mxu0 0
      %933 = vmatpush1.bf16.msra.mxu0 0
      %934 = vmatprep.subr.bf16.mxu0 0
      %935 = vmatpush1.bf16.msra.mxu0 0
      %936 = vmatprep.subr.bf16.mxu0 0
      %937 = vmatpush1.bf16.msra.mxu0 0
      %938 = vmatprep.subr.bf16.mxu0 0
      %939 = vmatpush1.bf16.msra.mxu0 0
      %940 = vmatprep.subr.bf16.mxu0 0
      %941 = vmatpush1.bf16.msra.mxu0 0
      %942 = vmatprep.subr.bf16.mxu0 0
      %943 = vmatpush1.bf16.msra.mxu0 0
      %944 = vmatprep.subr.bf16.mxu0 0
      %945 = vmatpush1.bf16.msra.mxu0 0
      %946 = vmatprep.subr.bf16.mxu0 0
      %947 = vmatpush1.bf16.msra.mxu0 0
      %948 = vmatprep.subr.bf16.mxu0 0
      %949 = vmatpush1.bf16.msra.mxu0 0
      %950 = vmatprep.subr.bf16.mxu0 0
      %951 = vmatpush1.bf16.msra.mxu0 0
      %952 = vmatprep.subr.bf16.mxu0 0
      %953 = vmatpush1.bf16.msra.mxu0 0
      %954 = vmatprep.subr.bf16.mxu0 0
      %955 = vmatpush1.bf16.msra.mxu0 0
      %956 = vmatprep.subr.bf16.mxu0 0
      %957 = vmatpush1.bf16.msra.mxu0 0
      %958 = vmatprep.subr.bf16.mxu0 0
      %959 = vmatpush1.bf16.msra.mxu0 0
      %960 = vmatprep.mubr.bf16.mxu0 0
      %961 = vmatmul.mubr.bf16.gmra.mrb[0].mxu0 %v926
      %v962 = vpop.f32.mrb[0].mxu0
      %v963 = vadd.f32 0.0, %v962
      %v964 = vpop.f32.mrb[0].mxu0
      %v965 = vadd.f32 0.0, %v964
      %v966 = vpop.f32.mrb[0].mxu0
      %v967 = vpop.f32.mrb[0].mxu0
      %968 = vdwg.mxu0
      %969 = vmatprep.subr.bf16.mxu0 0
      %970 = vmatpush1.bf16.msra.mxu0 %v907
      %971 = vmatprep.subr.bf16.mxu0 0
      %972 = vmatpush1.bf16.msra.mxu0 %v913
      %973 = vmatprep.subr.bf16.mxu0 0
      %974 = vmatpush1.bf16.msra.mxu0 0
      %975 = vmatprep.subr.bf16.mxu0 0
      %976 = vmatpush1.bf16.msra.mxu0 0
      %977 = vmatprep.subr.bf16.mxu0 0
      %978 = vmatpush1.bf16.msra.mxu0 0
      %979 = vmatprep.subr.bf16.mxu0 0
      %980 = vmatpush1.bf16.msra.mxu0 0
      %981 = vmatprep.subr.bf16.mxu0 0
      %982 = vmatpush1.bf16.msra.mxu0 0
      %983 = vmatprep.subr.bf16.mxu0 0
      %984 = vmatpush1.bf16.msra.mxu0 0
      %985 = vmatprep.subr.bf16.mxu0 0
      %986 = vmatpush1.bf16.msra.mxu0 0
      %987 = vmatprep.subr.bf16.mxu0 0
      %988 = vmatpush1.bf16.msra.mxu0 0
      %989 = vmatprep.subr.bf16.mxu0 0
      %990 = vmatpush1.bf16.msra.mxu0 0
      %991 = vmatprep.subr.bf16.mxu0 0
      %992 = vmatpush1.bf16.msra.mxu0 0
      %993 = vmatprep.subr.bf16.mxu0 0
      %994 = vmatpush1.bf16.msra.mxu0 0
      %995 = vmatprep.subr.bf16.mxu0 0
      %996 = vmatpush1.bf16.msra.mxu0 0
      %997 = vmatprep.subr.bf16.mxu0 0
      %998 = vmatpush1.bf16.msra.mxu0 0
      %999 = vmatprep.subr.bf16.mxu0 0
      %1000 = vmatpush1.bf16.msra.mxu0 0
      %1001 = vmatprep.mubr.bf16.mxu0 0
      %1002 = vmatmul.mubr.bf16.gmra.mrb[0].mxu0 %v926
      %v1003 = vpop.f32.mrb[0].mxu0
      %v1004 = vadd.f32 0.0, %v1003
      %v1005 = vpop.f32.mrb[0].mxu0
      %v1006 = vpop.f32.mrb[0].mxu0
      %v1007 = vpop.f32.mrb[0].mxu0
      %1008 = vdwg.mxu0
      %v1009 = vadd.f32 %v897, %v963
      %v1010 = vadd.f32 %v898, %v965
      %v1011 = vadd.f32 %v899, %v1004
      %s1012 = scalar_lea.vmem %s4, 20
      %v1013 = vld [vmem:[%s1012] sm:$0xf]
      %1014 = vrot.lane.b32.xlu0 %v469, 108
      %v1015 = vpop.permute.xlu0 %1014
      %1016 = vrot.lane.b32.xlu0 %v470, 108
      %v1017 = vpop.permute.xlu0 %1016
      %1018 = vrot.lane.b32.xlu0 %v471, 108
      %v1019 = vpop.permute.xlu0 %1018
      %1020 = vrot.lane.b32.xlu0 %v472, 108
      %v1021 = vpop.permute.xlu0 %1020
      %1022 = vrot.lane.b32.xlu0 %v473, 108
      %v1023 = vpop.permute.xlu0 %1022
      %1024 = vrot.lane.b32.xlu0 %v474, 108
      %v1025 = vpop.permute.xlu0 %1024
      %vm1026 = vcmask 883712
      %v1027 = vsel %vm1026, %v1015, %v1017
      %v1028 = vsel %vm1026, %v1017, %v1019
      %v1029 = vsel %vm1026, %v1021, %v1023
      %v1030 = vsel %vm1026, %v1023, %v1025
      %v1038 = vsel %vm507, %v1013, 0
      %1040 = vmatprep.subr.bf16.mxu0 %v1028
      %1041 = vmatpush1.bf16.msra.mxu0 %v1027
      %1042 = vmatprep.subr.bf16.mxu0 %v1030
      %1043 = vmatpush1.bf16.msra.mxu0 %v1029
      %1044 = vmatprep.subr.bf16.mxu0 0
      %1045 = vmatpush1.bf16.msra.mxu0 0
      %1046 = vmatprep.subr.bf16.mxu0 0
      %1047 = vmatpush1.bf16.msra.mxu0 0
      %1048 = vmatprep.subr.bf16.mxu0 0
      %1049 = vmatpush1.bf16.msra.mxu0 0
      %1050 = vmatprep.subr.bf16.mxu0 0
      %1051 = vmatpush1.bf16.msra.mxu0 0
      %1052 = vmatprep.subr.bf16.mxu0 0
      %1053 = vmatpush1.bf16.msra.mxu0 0
      %1054 = vmatprep.subr.bf16.mxu0 0
      %1055 = vmatpush1.bf16.msra.mxu0 0
      %1056 = vmatprep.subr.bf16.mxu0 0
      %1057 = vmatpush1.bf16.msra.mxu0 0
      %1058 = vmatprep.subr.bf16.mxu0 0
      %1059 = vmatpush1.bf16.msra.mxu0 0
      %1060 = vmatprep.subr.bf16.mxu0 0
      %1061 = vmatpush1.bf16.msra.mxu0 0
      %1062 = vmatprep.subr.bf16.mxu0 0
      %1063 = vmatpush1.bf16.msra.mxu0 0
      %1064 = vmatprep.subr.bf16.mxu0 0
      %1065 = vmatpush1.bf16.msra.mxu0 0
      %1066 = vmatprep.subr.bf16.mxu0 0
      %1067 = vmatpush1.bf16.msra.mxu0 0
      %1068 = vmatprep.subr.bf16.mxu0 0
      %1069 = vmatpush1.bf16.msra.mxu0 0
      %1070 = vmatprep.subr.bf16.mxu0 0
      %1071 = vmatpush1.bf16.msra.mxu0 0
      %1072 = vmatprep.mubr.bf16.mxu0 0
      %1073 = vmatmul.mubr.bf16.gmra.mrb[0].mxu0 %v1038
      %v1074 = vpop.f32.mrb[0].mxu0
      %v1075 = vadd.f32 0.0, %v1074
      %v1076 = vpop.f32.mrb[0].mxu0
      %v1077 = vadd.f32 0.0, %v1076
      %v1078 = vpop.f32.mrb[0].mxu0
      %v1079 = vpop.f32.mrb[0].mxu0
      %1080 = vdwg.mxu0
      %1081 = vmatprep.subr.bf16.mxu0 0
      %1082 = vmatpush1.bf16.msra.mxu0 %v1019
      %1083 = vmatprep.subr.bf16.mxu0 0
      %1084 = vmatpush1.bf16.msra.mxu0 %v1025
      %1085 = vmatprep.subr.bf16.mxu0 0
      %1086 = vmatpush1.bf16.msra.mxu0 0
      %1087 = vmatprep.subr.bf16.mxu0 0
      %1088 = vmatpush1.bf16.msra.mxu0 0
      %1089 = vmatprep.subr.bf16.mxu0 0
      %1090 = vmatpush1.bf16.msra.mxu0 0
      %1091 = vmatprep.subr.bf16.mxu0 0
      %1092 = vmatpush1.bf16.msra.mxu0 0
      %1093 = vmatprep.subr.bf16.mxu0 0
      %1094 = vmatpush1.bf16.msra.mxu0 0
      %1095 = vmatprep.subr.bf16.mxu0 0
      %1096 = vmatpush1.bf16.msra.mxu0 0
      %1097 = vmatprep.subr.bf16.mxu0 0
      %1098 = vmatpush1.bf16.msra.mxu0 0
      %1099 = vmatprep.subr.bf16.mxu0 0
      %1100 = vmatpush1.bf16.msra.mxu0 0
      %1101 = vmatprep.subr.bf16.mxu0 0
      %1102 = vmatpush1.bf16.msra.mxu0 0
      %1103 = vmatprep.subr.bf16.mxu0 0
      %1104 = vmatpush1.bf16.msra.mxu0 0
      %1105 = vmatprep.subr.bf16.mxu0 0
      %1106 = vmatpush1.bf16.msra.mxu0 0
      %1107 = vmatprep.subr.bf16.mxu0 0
      %1108 = vmatpush1.bf16.msra.mxu0 0
      %1109 = vmatprep.subr.bf16.mxu0 0
      %1110 = vmatpush1.bf16.msra.mxu0 0
      %1111 = vmatprep.subr.bf16.mxu0 0
      %1112 = vmatpush1.bf16.msra.mxu0 0
      %1113 = vmatprep.mubr.bf16.mxu0 0
      %1114 = vmatmul.mubr.bf16.gmra.mrb[0].mxu0 %v1038
      %v1115 = vpop.f32.mrb[0].mxu0
      %v1116 = vadd.f32 0.0, %v1115
      %v1117 = vpop.f32.mrb[0].mxu0
      %v1118 = vpop.f32.mrb[0].mxu0
      %v1119 = vpop.f32.mrb[0].mxu0
      %1120 = vdwg.mxu0
      %v1121 = vadd.f32 %v1009, %v1075
      %v1122 = vadd.f32 %v1010, %v1077
      %v1123 = vadd.f32 %v1011, %v1116
      %s1124 = scalar_lea.vmem %s4, 24
      %v1125 = vld [vmem:[%s1124] sm:$0xf]
      %1126 = vrot.lane.b32.xlu0 %v469, 92
      %v1127 = vpop.permute.xlu0 %1126
      %1128 = vrot.lane.b32.xlu0 %v470, 92
      %v1129 = vpop.permute.xlu0 %1128
      %1130 = vrot.lane.b32.xlu0 %v471, 92
      %v1131 = vpop.permute.xlu0 %1130
      %1132 = vrot.lane.b32.xlu0 %v472, 92
      %v1133 = vpop.permute.xlu0 %1132
      %1134 = vrot.lane.b32.xlu0 %v473, 92
      %v1135 = vpop.permute.xlu0 %1134
      %1136 = vrot.lane.b32.xlu0 %v474, 92
      %v1137 = vpop.permute.xlu0 %1136
      %vm1138 = vcmask 752640
      %v1139 = vsel %vm1138, %v1127, %v1129
      %v1140 = vsel %vm1138, %v1129, %v1131
      %v1141 = vsel %vm1138, %v1133, %v1135
      %v1142 = vsel %vm1138, %v1135, %v1137
      %v1150 = vsel %vm507, %v1125, 0
      %1152 = vmatprep.subr.bf16.mxu0 %v1140
      %1153 = vmatpush1.bf16.msra.mxu0 %v1139
      %1154 = vmatprep.subr.bf16.mxu0 %v1142
      %1155 = vmatpush1.bf16.msra.mxu0 %v1141
      %1156 = vmatprep.subr.bf16.mxu0 0
      %1157 = vmatpush1.bf16.msra.mxu0 0
      %1158 = vmatprep.subr.bf16.mxu0 0
      %1159 = vmatpush1.bf16.msra.mxu0 0
      %1160 = vmatprep.subr.bf16.mxu0 0
      %1161 = vmatpush1.bf16.msra.mxu0 0
      %1162 = vmatprep.subr.bf16.mxu0 0
      %1163 = vmatpush1.bf16.msra.mxu0 0
      %1164 = vmatprep.subr.bf16.mxu0 0
      %1165 = vmatpush1.bf16.msra.mxu0 0
      %1166 = vmatprep.subr.bf16.mxu0 0
      %1167 = vmatpush1.bf16.msra.mxu0 0
      %1168 = vmatprep.subr.bf16.mxu0 0
      %1169 = vmatpush1.bf16.msra.mxu0 0
      %1170 = vmatprep.subr.bf16.mxu0 0
      %1171 = vmatpush1.bf16.msra.mxu0 0
      %1172 = vmatprep.subr.bf16.mxu0 0
      %1173 = vmatpush1.bf16.msra.mxu0 0
      %1174 = vmatprep.subr.bf16.mxu0 0
      %1175 = vmatpush1.bf16.msra.mxu0 0
      %1176 = vmatprep.subr.bf16.mxu0 0
      %1177 = vmatpush1.bf16.msra.mxu0 0
      %1178 = vmatprep.subr.bf16.mxu0 0
      %1179 = vmatpush1.bf16.msra.mxu0 0
      %1180 = vmatprep.subr.bf16.mxu0 0
      %1181 = vmatpush1.bf16.msra.mxu0 0
      %1182 = vmatprep.subr.bf16.mxu0 0
      %1183 = vmatpush1.bf16.msra.mxu0 0
      %1184 = vmatprep.mubr.bf16.mxu0 0
      %1185 = vmatmul.mubr.bf16.gmra.mrb[0].mxu0 %v1150
      %v1186 = vpop.f32.mrb[0].mxu0
      %v1187 = vadd.f32 0.0, %v1186
      %v1188 = vpop.f32.mrb[0].mxu0
      %v1189 = vadd.f32 0.0, %v1188
      %v1190 = vpop.f32.mrb[0].mxu0
      %v1191 = vpop.f32.mrb[0].mxu0
      %1192 = vdwg.mxu0
      %1193 = vmatprep.subr.bf16.mxu0 0
      %1194 = vmatpush1.bf16.msra.mxu0 %v1131
      %1195 = vmatprep.subr.bf16.mxu0 0
      %1196 = vmatpush1.bf16.msra.mxu0 %v1137
      %1197 = vmatprep.subr.bf16.mxu0 0
      %1198 = vmatpush1.bf16.msra.mxu0 0
      %1199 = vmatprep.subr.bf16.mxu0 0
      %1200 = vmatpush1.bf16.msra.mxu0 0
      %1201 = vmatprep.subr.bf16.mxu0 0
      %1202 = vmatpush1.bf16.msra.mxu0 0
      %1203 = vmatprep.subr.bf16.mxu0 0
      %1204 = vmatpush1.bf16.msra.mxu0 0
      %1205 = vmatprep.subr.bf16.mxu0 0
      %1206 = vmatpush1.bf16.msra.mxu0 0
      %1207 = vmatprep.subr.bf16.mxu0 0
      %1208 = vmatpush1.bf16.msra.mxu0 0
      %1209 = vmatprep.subr.bf16.mxu0 0
      %1210 = vmatpush1.bf16.msra.mxu0 0
      %1211 = vmatprep.subr.bf16.mxu0 0
      %1212 = vmatpush1.bf16.msra.mxu0 0
      %1213 = vmatprep.subr.bf16.mxu0 0
      %1214 = vmatpush1.bf16.msra.mxu0 0
      %1215 = vmatprep.subr.bf16.mxu0 0
      %1216 = vmatpush1.bf16.msra.mxu0 0
      %1217 = vmatprep.subr.bf16.mxu0 0
      %1218 = vmatpush1.bf16.msra.mxu0 0
      %1219 = vmatprep.subr.bf16.mxu0 0
      %1220 = vmatpush1.bf16.msra.mxu0 0
      %1221 = vmatprep.subr.bf16.mxu0 0
      %1222 = vmatpush1.bf16.msra.mxu0 0
      %1223 = vmatprep.subr.bf16.mxu0 0
      %1224 = vmatpush1.bf16.msra.mxu0 0
      %1225 = vmatprep.mubr.bf16.mxu0 0
      %1226 = vmatmul.mubr.bf16.gmra.mrb[0].mxu0 %v1150
      %v1227 = vpop.f32.mrb[0].mxu0
      %v1228 = vadd.f32 0.0, %v1227
      %v1229 = vpop.f32.mrb[0].mxu0
      %v1230 = vpop.f32.mrb[0].mxu0
      %v1231 = vpop.f32.mrb[0].mxu0
      %1232 = vdwg.mxu0
      %v1233 = vadd.f32 %v1121, %v1187
      %v1234 = vadd.f32 %v1122, %v1189
      %v1235 = vadd.f32 %v1123, %v1228
      %s1236 = scalar_lea.vmem %s4, 28
      %v1237 = vld [vmem:[%s1236] sm:$0xf]
      %1238 = vrot.lane.b32.xlu0 %v469, 91
      %v1239 = vpop.permute.xlu0 %1238
      %1240 = vrot.lane.b32.xlu0 %v470, 91
      %v1241 = vpop.permute.xlu0 %1240
      %1242 = vrot.lane.b32.xlu0 %v471, 91
      %v1243 = vpop.permute.xlu0 %1242
      %1244 = vrot.lane.b32.xlu0 %v472, 91
      %v1245 = vpop.permute.xlu0 %1244
      %1246 = vrot.lane.b32.xlu0 %v473, 91
      %v1247 = vpop.permute.xlu0 %1246
      %1248 = vrot.lane.b32.xlu0 %v474, 91
      %v1249 = vpop.permute.xlu0 %1248
      %vm1250 = vcmask 744448
      %v1251 = vsel %vm1250, %v1239, %v1241
      %v1252 = vsel %vm1250, %v1241, %v1243
      %v1253 = vsel %vm1250, %v1245, %v1247
      %v1254 = vsel %vm1250, %v1247, %v1249
      %v1262 = vsel %vm507, %v1237, 0
      %1264 = vmatprep.subr.bf16.mxu0 %v1252
      %1265 = vmatpush1.bf16.msra.mxu0 %v1251
      %1266 = vmatprep.subr.bf16.mxu0 %v1254
      %1267 = vmatpush1.bf16.msra.mxu0 %v1253
      %1268 = vmatprep.subr.bf16.mxu0 0
      %1269 = vmatpush1.bf16.msra.mxu0 0
      %1270 = vmatprep.subr.bf16.mxu0 0
      %1271 = vmatpush1.bf16.msra.mxu0 0
      %1272 = vmatprep.subr.bf16.mxu0 0
      %1273 = vmatpush1.bf16.msra.mxu0 0
      %1274 = vmatprep.subr.bf16.mxu0 0
      %1275 = vmatpush1.bf16.msra.mxu0 0
      %1276 = vmatprep.subr.bf16.mxu0 0
      %1277 = vmatpush1.bf16.msra.mxu0 0
      %1278 = vmatprep.subr.bf16.mxu0 0
      %1279 = vmatpush1.bf16.msra.mxu0 0
      %1280 = vmatprep.subr.bf16.mxu0 0
      %1281 = vmatpush1.bf16.msra.mxu0 0
      %1282 = vmatprep.subr.bf16.mxu0 0
      %1283 = vmatpush1.bf16.msra.mxu0 0
      %1284 = vmatprep.subr.bf16.mxu0 0
      %1285 = vmatpush1.bf16.msra.mxu0 0
      %1286 = vmatprep.subr.bf16.mxu0 0
      %1287 = vmatpush1.bf16.msra.mxu0 0
      %1288 = vmatprep.subr.bf16.mxu0 0
      %1289 = vmatpush1.bf16.msra.mxu0 0
      %1290 = vmatprep.subr.bf16.mxu0 0
      %1291 = vmatpush1.bf16.msra.mxu0 0
      %1292 = vmatprep.subr.bf16.mxu0 0
      %1293 = vmatpush1.bf16.msra.mxu0 0
      %1294 = vmatprep.subr.bf16.mxu0 0
      %1295 = vmatpush1.bf16.msra.mxu0 0
      %1296 = vmatprep.mubr.bf16.mxu0 0
      %1297 = vmatmul.mubr.bf16.gmra.mrb[0].mxu0 %v1262
      %v1298 = vpop.f32.mrb[0].mxu0
      %v1299 = vadd.f32 0.0, %v1298
      %v1300 = vpop.f32.mrb[0].mxu0
      %v1301 = vadd.f32 0.0, %v1300
      %v1302 = vpop.f32.mrb[0].mxu0
      %v1303 = vpop.f32.mrb[0].mxu0
      %1304 = vdwg.mxu0
      %1305 = vmatprep.subr.bf16.mxu0 0
      %1306 = vmatpush1.bf16.msra.mxu0 %v1243
      %1307 = vmatprep.subr.bf16.mxu0 0
      %1308 = vmatpush1.bf16.msra.mxu0 %v1249
      %1309 = vmatprep.subr.bf16.mxu0 0
      %1310 = vmatpush1.bf16.msra.mxu0 0
      %1311 = vmatprep.subr.bf16.mxu0 0
      %1312 = vmatpush1.bf16.msra.mxu0 0
      %1313 = vmatprep.subr.bf16.mxu0 0
      %1314 = vmatpush1.bf16.msra.mxu0 0
      %1315 = vmatprep.subr.bf16.mxu0 0
      %1316 = vmatpush1.bf16.msra.mxu0 0
      %1317 = vmatprep.subr.bf16.mxu0 0
      %1318 = vmatpush1.bf16.msra.mxu0 0
      %1319 = vmatprep.subr.bf16.mxu0 0
      %1320 = vmatpush1.bf16.msra.mxu0 0
      %1321 = vmatprep.subr.bf16.mxu0 0
      %1322 = vmatpush1.bf16.msra.mxu0 0
      %1323 = vmatprep.subr.bf16.mxu0 0
      %1324 = vmatpush1.bf16.msra.mxu0 0
      %1325 = vmatprep.subr.bf16.mxu0 0
      %1326 = vmatpush1.bf16.msra.mxu0 0
      %1327 = vmatprep.subr.bf16.mxu0 0
      %1328 = vmatpush1.bf16.msra.mxu0 0
      %1329 = vmatprep.subr.bf16.mxu0 0
      %1330 = vmatpush1.bf16.msra.mxu0 0
      %1331 = vmatprep.subr.bf16.mxu0 0
      %1332 = vmatpush1.bf16.msra.mxu0 0
      %1333 = vmatprep.subr.bf16.mxu0 0
      %1334 = vmatpush1.bf16.msra.mxu0 0
      %1335 = vmatprep.subr.bf16.mxu0 0
      %1336 = vmatpush1.bf16.msra.mxu0 0
      %1337 = vmatprep.mubr.bf16.mxu0 0
      %1338 = vmatmul.mubr.bf16.gmra.mrb[0].mxu0 %v1262
      %v1339 = vpop.f32.mrb[0].mxu0
      %v1340 = vadd.f32 0.0, %v1339
      %v1341 = vpop.f32.mrb[0].mxu0
      %v1342 = vpop.f32.mrb[0].mxu0
      %v1343 = vpop.f32.mrb[0].mxu0
      %1344 = vdwg.mxu0
      %v1345 = vadd.f32 %v1233, %v1299
      %v1346 = vadd.f32 %v1234, %v1301
      %v1347 = vadd.f32 %v1235, %v1340
      %s1348 = scalar_lea.vmem %s4, 32
      %v1349 = vld [vmem:[%s1348] sm:$0xf]
      %1350 = vrot.lane.b32.xlu0 %v469, 90
      %v1351 = vpop.permute.xlu0 %1350
      %1352 = vrot.lane.b32.xlu0 %v470, 90
      %v1353 = vpop.permute.xlu0 %1352
      %1354 = vrot.lane.b32.xlu0 %v471, 90
      %v1355 = vpop.permute.xlu0 %1354
      %1356 = vrot.lane.b32.xlu0 %v472, 90
      %v1357 = vpop.permute.xlu0 %1356
      %1358 = vrot.lane.b32.xlu0 %v473, 90
      %v1359 = vpop.permute.xlu0 %1358
      %1360 = vrot.lane.b32.xlu0 %v474, 90
      %v1361 = vpop.permute.xlu0 %1360
      %vm1362 = vcmask 736256
      %v1363 = vsel %vm1362, %v1351, %v1353
      %v1364 = vsel %vm1362, %v1353, %v1355
      %v1365 = vsel %vm1362, %v1357, %v1359
      %v1366 = vsel %vm1362, %v1359, %v1361
      %v1374 = vsel %vm507, %v1349, 0
      %1376 = vmatprep.subr.bf16.mxu0 %v1364
      %1377 = vmatpush1.bf16.msra.mxu0 %v1363
      %1378 = vmatprep.subr.bf16.mxu0 %v1366
      %1379 = vmatpush1.bf16.msra.mxu0 %v1365
      %1380 = vmatprep.subr.bf16.mxu0 0
      %1381 = vmatpush1.bf16.msra.mxu0 0
      %1382 = vmatprep.subr.bf16.mxu0 0
      %1383 = vmatpush1.bf16.msra.mxu0 0
      %1384 = vmatprep.subr.bf16.mxu0 0
      %1385 = vmatpush1.bf16.msra.mxu0 0
      %1386 = vmatprep.subr.bf16.mxu0 0
      %1387 = vmatpush1.bf16.msra.mxu0 0
      %1388 = vmatprep.subr.bf16.mxu0 0
      %1389 = vmatpush1.bf16.msra.mxu0 0
      %1390 = vmatprep.subr.bf16.mxu0 0
      %1391 = vmatpush1.bf16.msra.mxu0 0
      %1392 = vmatprep.subr.bf16.mxu0 0
      %1393 = vmatpush1.bf16.msra.mxu0 0
      %1394 = vmatprep.subr.bf16.mxu0 0
      %1395 = vmatpush1.bf16.msra.mxu0 0
      %1396 = vmatprep.subr.bf16.mxu0 0
      %1397 = vmatpush1.bf16.msra.mxu0 0
      %1398 = vmatprep.subr.bf16.mxu0 0
      %1399 = vmatpush1.bf16.msra.mxu0 0
      %1400 = vmatprep.subr.bf16.mxu0 0
      %1401 = vmatpush1.bf16.msra.mxu0 0
      %1402 = vmatprep.subr.bf16.mxu0 0
      %1403 = vmatpush1.bf16.msra.mxu0 0
      %1404 = vmatprep.subr.bf16.mxu0 0
      %1405 = vmatpush1.bf16.msra.mxu0 0
      %1406 = vmatprep.subr.bf16.mxu0 0
      %1407 = vmatpush1.bf16.msra.mxu0 0
      %1408 = vmatprep.mubr.bf16.mxu0 0
      %1409 = vmatmul.mubr.bf16.gmra.mrb[0].mxu0 %v1374
      %v1410 = vpop.f32.mrb[0].mxu0
      %v1411 = vadd.f32 0.0, %v1410
      %v1412 = vpop.f32.mrb[0].mxu0
      %v1413 = vadd.f32 0.0, %v1412
      %v1414 = vpop.f32.mrb[0].mxu0
      %v1415 = vpop.f32.mrb[0].mxu0
      %1416 = vdwg.mxu0
      %1417 = vmatprep.subr.bf16.mxu0 0
      %1418 = vmatpush1.bf16.msra.mxu0 %v1355
      %1419 = vmatprep.subr.bf16.mxu0 0
      %1420 = vmatpush1.bf16.msra.mxu0 %v1361
      %1421 = vmatprep.subr.bf16.mxu0 0
      %1422 = vmatpush1.bf16.msra.mxu0 0
      %1423 = vmatprep.subr.bf16.mxu0 0
      %1424 = vmatpush1.bf16.msra.mxu0 0
      %1425 = vmatprep.subr.bf16.mxu0 0
      %1426 = vmatpush1.bf16.msra.mxu0 0
      %1427 = vmatprep.subr.bf16.mxu0 0
      %1428 = vmatpush1.bf16.msra.mxu0 0
      %1429 = vmatprep.subr.bf16.mxu0 0
      %1430 = vmatpush1.bf16.msra.mxu0 0
      %1431 = vmatprep.subr.bf16.mxu0 0
      %1432 = vmatpush1.bf16.msra.mxu0 0
      %1433 = vmatprep.subr.bf16.mxu0 0
      %1434 = vmatpush1.bf16.msra.mxu0 0
      %1435 = vmatprep.subr.bf16.mxu0 0
      %1436 = vmatpush1.bf16.msra.mxu0 0
      %1437 = vmatprep.subr.bf16.mxu0 0
      %1438 = vmatpush1.bf16.msra.mxu0 0
      %1439 = vmatprep.subr.bf16.mxu0 0
      %1440 = vmatpush1.bf16.msra.mxu0 0
      %1441 = vmatprep.subr.bf16.mxu0 0
      %1442 = vmatpush1.bf16.msra.mxu0 0
      %1443 = vmatprep.subr.bf16.mxu0 0
      %1444 = vmatpush1.bf16.msra.mxu0 0
      %1445 = vmatprep.subr.bf16.mxu0 0
      %1446 = vmatpush1.bf16.msra.mxu0 0
      %1447 = vmatprep.subr.bf16.mxu0 0
      %1448 = vmatpush1.bf16.msra.mxu0 0
      %1449 = vmatprep.mubr.bf16.mxu0 0
      %1450 = vmatmul.mubr.bf16.gmra.mrb[0].mxu0 %v1374
      %v1451 = vpop.f32.mrb[0].mxu0
      %v1452 = vadd.f32 0.0, %v1451
      %v1453 = vpop.f32.mrb[0].mxu0
      %v1454 = vpop.f32.mrb[0].mxu0
      %v1455 = vpop.f32.mrb[0].mxu0
      %1456 = vdwg.mxu0
      %v1457 = vadd.f32 %v1345, %v1411
      %v1458 = vadd.f32 %v1346, %v1413
      %v1459 = vadd.f32 %v1347, %v1452
      %v1460 = vld [vmem:[%s5] sm:$0xff]
      %1462 = vset.pattern.permute.xlu0 0
      %1463 = vperm.xlu0 %1462, %v1460
      %v1464 = vpop.permute.xlu0 %1463
      %v1466 = vadd.f32 %v1457, %v1464
      %v1467 = vadd.f32 %v1458, %v1464
      %v1468 = vadd.f32 %v1459, %v1464
      %v1469 = vmax.f32 %v1466, 0.0
      %v1470 = vmax.f32 %v1467, 0.0
      %v1471 = vmax.f32 %v1468, 0.0
      %1472 = vst [vmem:[%s251] sm:$0xff] %v1469
      %1473 = vst [vmem:[%s251 + $0x8] sm:$0xff] %v1470
      %1474 = vst.msk [vmem:[%s251 + $0x10] sm:$0xff] %vm507, %v1471
      %p1475 = scmp.lt.s32.totalorder %s17, 1
      %s1476 = scalar_select %p1475, %s17, 1
      %s1477 = smul.addr %s1476, 3
      %s1478 = smul.addr %s1477, 8
      %s1479 = scalar_lea.vmem %s6, %s1478
      // Predicated region
      $region45: #{denselayer_bc_forward.1} parent=43 // pred_check
        %p1480 = pneg %p166
      $region46: #{denselayer_bc_forward.1} parent=43 // pred_check_branch
        %1482 = sbr.rel (%p1480) target = $region48
      $region47: #{denselayer_bc_forward.1} parent=43 // pred_region
        _
      $region48: #{denselayer_bc_forward.1} parent=43 // pred_fallthru
        _
    $region44: #{denselayer_bc_forward.1} parent=5 // pred_fallthru
      _
    %p1483 = scmp.le.s32.totalorder 2, %s12
    // Predicated region
    $region49: #{denselayer_bc_forward.1} parent=5 // pred_check
      %p1484 = pneg %p1483
    $region50: #{denselayer_bc_forward.1} parent=5 // pred_check_branch
      %1486 = sbr.rel (%p1484) target = $region52
    $region51: #{denselayer_bc_forward.1} parent=5 // pred_region
      %s1487 = ssub.s32 %s12, 2
      // Predicated region
      $region53: #{denselayer_bc_forward.1} parent=51 // pred_check
        %p1488 = pneg %p172
      $region54: #{denselayer_bc_forward.1} parent=51 // pred_check_branch
        %1490 = sbr.rel (%p1488) target = $region56
      $region55: #{denselayer_bc_forward.1} parent=51 // pred_region
        %p1491 = scmp.lt.s32.totalorder %s18, 1
        %s1492 = scalar_select %p1491, %s18, 1
        %s1493 = smul.addr %s1492, 3
        %s1494 = smul.addr %s1493, 8
        %s1495 = scalar_lea.vmem %s6, %s1494
      $region56: #{denselayer_bc_forward.1} parent=51 // pred_fallthru
        _
    $region52: #{denselayer_bc_forward.1} parent=5 // pred_fallthru
      _
  $region6: #{denselayer_bc_forward.1} parent=0 // loop_footer
    %s16 = sadd.s32 1, %s12
  $region7: #{denselayer_bc_forward.1} parent=0 // loop_footer_branch
    %11 = sbr.rel target = $region3
  $region8: #{denselayer_bc_forward.1} parent=0 // loop_exit
    _

</llo_original>
